<compile_context>
chip_gen: v7x
topology: tpu7x:2x2x1
jax: 0.10.0
libtpu: 0.0.40
codegen_flags: <defaults>
</compile_context>

<pallas_src>
import math

import jax
import jax.numpy as jnp
from jax import lax
from jax.experimental import pallas as pl
from jax.experimental.pallas import tpu as pltpu

HID_PAD = 128                 # lane width: gates / outputs padded to 128 lanes
MXU_DTYPE = jnp.bfloat16      # dtype of the operands fed to the MXU


def _round_up(x, m):
    return (x + m - 1) // m * m


def gru_encoder_kernel(x_ref, len_ref, wih_ref, whh_ref, bif_ref, bhn_ref,
                       out_ref, hlast_ref, gi_ref):
    """Single-layer unidirectional GRU over time, with length masking.

    x_ref:    (T*Bp, E)    bf16 embedded inputs, time-major rows (row = t*Bp+b)
    len_ref:  (Bp, 1)      int32 valid lengths (0 for padded batch rows)
    wih_ref:  (E, 3*Hp)    bf16 input->gates weights, transposed, gate-aligned
    whh_ref:  (Hp, 3*Hp)   bf16 hidden->gates weights, transposed, gate-aligned
    bif_ref:  (1, 3*Hp)    f32 folded bias: [b_ir+b_hr | b_iz+b_hz | b_in]
    bhn_ref:  (1, Hp)      f32 n-gate hidden bias b_hn (kept inside r*(...))
    out_ref:  (T*Bp, Hp)   f32 per-step outputs (zero past length)
    hlast_ref:(Bp, Hp)     f32 final hidden state (state at last valid step)
    gi_ref:   (T*Bp, 3*Hp) f32 VMEM scratch for the hoisted input projection
    """
    Bp = hlast_ref.shape[0]
    Hp = hlast_ref.shape[1]
    T = x_ref.shape[0] // Bp

    # --- Hoisted input projection: one big MXU matmul for ALL timesteps, with
    # the loop-invariant r/z hidden biases already folded into bif.
    gi_ref[...] = (jnp.dot(x_ref[...], wih_ref[...],
                           preferred_element_type=jnp.float32)
                   + bif_ref[...])

    # Loaded / broadcast ONCE; loop-invariant across the serial recurrence.
    lengths = len_ref[...]                                    # (Bp, 1) int32
    b_hn = jnp.broadcast_to(bhn_ref[...], (Bp, Hp))           # (Bp, Hp) f32

    def step(t, h_prev):
        row = pl.multiple_of(t * Bp, Bp)                      # sublane-aligned
        gi = gi_ref[pl.ds(row, Bp), :]                        # (Bp, 3*Hp) f32
        # bf16 MXU operands, f32 accumulate.  Only the matmul operand is
        # rounded to bf16 -- the f32 h carry itself is never truncated.
        gh = jnp.dot(h_prev.astype(whh_ref.dtype), whh_ref[...],
                     preferred_element_type=jnp.float32)      # (Bp, 3*Hp) f32

        # 128-lane aligned gate slices ([r | z | n], PyTorch convention).
        r = jax.nn.sigmoid(gi[:, 0 * Hp:1 * Hp] + gh[:, 0 * Hp:1 * Hp])
        z = jax.nn.sigmoid(gi[:, 1 * Hp:2 * Hp] + gh[:, 1 * Hp:2 * Hp])
        n = jnp.tanh(gi[:, 2 * Hp:3 * Hp] + r * (gh[:, 2 * Hp:3 * Hp] + b_hn))
        h_new = n + z * (h_prev - n)                          # == (1-z)*n + z*h

        # packed-sequence semantics: zero outputs and freeze h past length.
        valid = lengths > t                                   # (Bp, 1) bool
        out_ref[pl.ds(row, Bp), :] = jnp.where(valid, h_new, 0.0).astype(
            out_ref.dtype)
        return jnp.where(valid, h_new, h_prev)

    # Full unroll only for short sequences; partial unroll avoids vreg spills
    # (each unrolled step streams the 128x384 weight tile plus gate temps).
    unroll = True if T <= 8 else 4
    h0 = jnp.zeros((Bp, Hp), jnp.float32)
    h_last = lax.fori_loop(0, T, step, h0, unroll=unroll)
    hlast_ref[...] = h_last.astype(hlast_ref.dtype)


def make_params(key, vocab, emb_dim, hid_dim, hid_pad=HID_PAD,
                mxu_dtype=MXU_DTYPE):
    bound = 1.0 / math.sqrt(hid_dim)
    ks = jax.random.split(key, 5)
    embedding = jax.random.normal(ks[0], (vocab, emb_dim), jnp.float32) * 0.1
    w_ih = jax.random.uniform(ks[1], (3 * hid_dim, emb_dim), jnp.float32,
                              minval=-bound, maxval=bound)
    w_hh = jax.random.uniform(ks[2], (3 * hid_dim, hid_dim), jnp.float32,
                              minval=-bound, maxval=bound)
    b_ih = jax.random.uniform(ks[3], (3 * hid_dim,), jnp.float32,
                              minval=-bound, maxval=bound)
    b_hh = jax.random.uniform(ks[4], (3 * hid_dim,), jnp.float32,
                              minval=-bound, maxval=bound)

    def pad_w_T(w, in_dim, in_pad):
        # w: (3H, in_dim) -> (in_pad, 3*hid_pad), transposed, each gate block
        # placed at a 128-lane aligned offset; padding is zero (exact math).
        out = jnp.zeros((in_pad, 3 * hid_pad), jnp.float32)
        for g in range(3):
            blk = w[g * hid_dim:(g + 1) * hid_dim, :].T       # (in_dim, H)
            out = out.at[:in_dim, g * hid_pad:g * hid_pad + hid_dim].set(blk)
        return out.astype(mxu_dtype)

    # Fold the loop-invariant r/z hidden biases into the input-side bias.
    # b_hn MUST stay inside r*(gh_n + b_hn), so it is passed separately.
    b_fold = jnp.zeros((1, 3 * hid_pad), jnp.float32)
    for g in range(3):
        b = b_ih[g * hid_dim:(g + 1) * hid_dim]
        if g < 2:
            b = b + b_hh[g * hid_dim:(g + 1) * hid_dim]
        b_fold = b_fold.at[0, g * hid_pad:g * hid_pad + hid_dim].set(b)
    b_hn = jnp.zeros((1, hid_pad), jnp.float32)
    b_hn = b_hn.at[0, :hid_dim].set(b_hh[2 * hid_dim:])

    return {
        "hid_dim": hid_dim,
        "hid_pad": hid_pad,
        "embedding": embedding,
        # padded / gate-aligned copies consumed by the Pallas kernel
        "w_ih_T_pad": pad_w_T(w_ih, emb_dim, emb_dim),        # (E, 3*Hp) bf16
        "w_hh_T_pad": pad_w_T(w_hh, hid_dim, hid_pad),        # (Hp,3*Hp) bf16
        "b_i_fold_pad": b_fold,                               # (1, 3*Hp) f32
        "b_hn_pad": b_hn,                                     # (1, Hp)   f32
        # unpadded f32 copies for the pure-JAX reference
        "w_ih_T": jnp.transpose(w_ih),                        # (E, 3H)
        "w_hh_T": jnp.transpose(w_hh),                        # (H, 3H)
        "b_ih": b_ih.reshape(1, -1),                          # (1, 3H)
        "b_hh": b_hh.reshape(1, -1),                          # (1, 3H)
    }


def encoder_forward(bare, length, params):
    """Equivalent of Encoder.forward(bare, length) (GRU, n_layer=1, uni).

    bare:   (B, T) int32 token ids
    length: (B,)   int32 valid lengths
    returns outputs (B, T, H), last_states (n_layer*n_dir=1, B, H)
    """
    emb = params["embedding"][bare]                  # (B, T, E) gather (glue)
    B, T, E = emb.shape
    H = params["hid_dim"]
    Hp = params["hid_pad"]
    Bp = _round_up(B, 8)                             # sublane-width batch pad

    # nn.Dropout in eval mode / p=0 is the identity.
    # TODO(synk): training-mode dropout (stateful PRNG) not implemented.
    mxu_dtype = params["w_ih_T_pad"].dtype
    x = jnp.transpose(emb, (1, 0, 2))                          # (T, B, E)
    x = jnp.pad(x, ((0, 0), (0, Bp - B), (0, 0)))              # (T, Bp, E)
    x2d = x.reshape(T * Bp, E).astype(mxu_dtype)               # row = t*Bp + b

    len_pad = jnp.pad(length.astype(jnp.int32), (0, Bp - B)).reshape(Bp, 1)

    # Explicit scoped-VMEM budget sized from the actual footprint (+headroom);
    # respects v5e's 16 MiB default scoped limit and v7x's 64 MiB physical VMEM.
    mxu_isz = jnp.dtype(mxu_dtype).itemsize
    est = (T * Bp * E * mxu_isz            # x2d
           + T * Bp * 3 * Hp * 4           # gi scratch (f32)
           + T * Bp * Hp * 4               # out
           + (E + Hp) * 3 * Hp * mxu_isz   # weights
           + Bp * Hp * 4 + 4 * Hp * 4 + Bp * 4)
    vmem_limit = int(min(max(2 * est + (4 << 20), 16 << 20), 32 << 20))

    vmem = pl.BlockSpec(memory_space=pltpu.MemorySpace.VMEM)
    out2d, h_last = pl.pallas_call(
        gru_encoder_kernel,
        out_shape=(jax.ShapeDtypeStruct((T * Bp, Hp), jnp.float32),
                   jax.ShapeDtypeStruct((Bp, Hp), jnp.float32)),
        in_specs=[vmem] * 6,
        out_specs=(vmem, vmem),
        scratch_shapes=[pltpu.VMEM((T * Bp, 3 * Hp), jnp.float32)],
        compiler_params=pltpu.CompilerParams(vmem_limit_bytes=vmem_limit),
    )(x2d, len_pad, params["w_ih_T_pad"], params["w_hh_T_pad"],
      params["b_i_fold_pad"], params["b_hn_pad"])

    outputs = out2d.reshape(T, Bp, Hp)[:, :B, :H]    # drop batch/lane padding
    outputs = jnp.transpose(outputs, (1, 0, 2))      # (B, T, H)
    last_states = h_last[None, :B, :H]               # (1, B, H)
    return outputs, last_states


def _ref_forward(bare, length, params):
    """Pure-JAX f32 reference of the same semantics (for a sanity check)."""
    emb = params["embedding"][bare]
    B, T, E = emb.shape
    H = params["hid_dim"]
    x = jnp.transpose(emb, (1, 0, 2)).astype(jnp.float32)
    t_ids = jnp.arange(T, dtype=jnp.int32)[:, None]
    mask = (t_ids < length[None, :]).astype(jnp.float32)[..., None]

    def step(h, inp):
        x_t, m_t = inp
        gi = x_t @ params["w_ih_T"] + params["b_ih"]
        gh = h @ params["w_hh_T"] + params["b_hh"]
        r = jax.nn.sigmoid(gi[:, :H] + gh[:, :H])
        z = jax.nn.sigmoid(gi[:, H:2 * H] + gh[:, H:2 * H])
        n = jnp.tanh(gi[:, 2 * H:] + r * gh[:, 2 * H:])
        h_new = (1.0 - z) * n + z * h
        return m_t * h_new + (1.0 - m_t) * h, m_t * h_new

    h0 = jnp.zeros((B, H), jnp.float32)
    h_last, outs = lax.scan(step, h0, (x, mask))
    return jnp.transpose(outs, (1, 0, 2)), h_last[None, :, :]


if __name__ == "__main__":
    B, T, E, H, V = 4, 8, 16, 32, 20   # emb_dim=16, hid_dim=32, n_layer=1, bi=False

    key = jax.random.PRNGKey(0)
    k_par, k_tok = jax.random.split(key)
    params = make_params(k_par, V, E, H)

    bare = jax.random.randint(k_tok, (B, T), 1, V, dtype=jnp.int32)
    length = jnp.array([5, 8, 3, 7], dtype=jnp.int32)

    outputs, last_states = encoder_forward(bare, length, params)
    outputs = jax.block_until_ready(outputs)
    last_states = jax.block_until_ready(last_states)

    assert outputs.shape == (B, T, H)
    assert last_states.shape == (1, B, H)

    ref_out, ref_last = _ref_forward(bare, length, params)
    # bf16 MXU operands with f32 accumulation / f32 state => ~1e-2 tolerance.
    assert jnp.allclose(outputs, ref_out, atol=2e-2, rtol=2e-2)
    assert jnp.allclose(last_states, ref_last, atol=2e-2, rtol=2e-2)

    print("KERNEL_OK")
</pallas_src>

<mosaic_0001>
module attributes {stable_mosaic.version = 11 : i64} {
  func.func @gru_encoder_kernel(%arg0: memref<64x16xbf16, #tpu.memory_space<vmem>>, %arg1: memref<8x1xi32, #tpu.memory_space<vmem>>, %arg2: memref<16x384xbf16, #tpu.memory_space<vmem>>, %arg3: memref<128x384xbf16, #tpu.memory_space<vmem>>, %arg4: memref<1x384xf32, #tpu.memory_space<vmem>>, %arg5: memref<1x128xf32, #tpu.memory_space<vmem>>, %arg6: memref<64x128xf32, #tpu.memory_space<vmem>>, %arg7: memref<8x128xf32, #tpu.memory_space<vmem>>, %arg8: memref<64x384xf32, #tpu.memory_space<vmem>>) attributes {dimension_semantics = [], scalar_prefetch = 0 : i64, scratch_operands = 1 : i64, tpu.core_type = #tpu.core_type<tc>} {
    %c0 = arith.constant 0 : index
    %c0_0 = arith.constant 0 : index
    %0 = vector.load %arg0[%c0, %c0_0] : memref<64x16xbf16, #tpu.memory_space<vmem>>, vector<64x16xbf16>
    %c0_1 = arith.constant 0 : index
    %c0_2 = arith.constant 0 : index
    %1 = vector.load %arg2[%c0_1, %c0_2] : memref<16x384xbf16, #tpu.memory_space<vmem>>, vector<16x384xbf16>
    %cst = arith.constant dense<0.000000e+00> : vector<64x384xf32>
    %2 = tpu.matmul %0, %1, %cst {dimension_numbers = #tpu.dot_dimension_numbers<[1], [0], [0], [1], [0, 0, 1, 1], [], []>} : vector<64x16xbf16>, vector<16x384xbf16>, vector<64x384xf32> -> vector<64x384xf32>
    %c0_3 = arith.constant 0 : index
    %c0_4 = arith.constant 0 : index
    %3 = vector.load %arg4[%c0_3, %c0_4] : memref<1x384xf32, #tpu.memory_space<vmem>>, vector<1x384xf32>
    %4 = vector.broadcast %3 : vector<1x384xf32> to vector<64x384xf32>
    %5 = arith.addf %2, %4 : vector<64x384xf32>
    %c0_5 = arith.constant 0 : index
    %c0_6 = arith.constant 0 : index
    %6 = vector.load %arg8[%c0_5, %c0_6] : memref<64x384xf32, #tpu.memory_space<vmem>>, vector<64x384xf32>
    tpu.vector_store %arg8[%c0_5, %c0_6], %5 {strides = array<i32>} : memref<64x384xf32, #tpu.memory_space<vmem>>, vector<64x384xf32>,
    %c0_7 = arith.constant 0 : index
    %c0_8 = arith.constant 0 : index
    %7 = vector.load %arg1[%c0_7, %c0_8] : memref<8x1xi32, #tpu.memory_space<vmem>>, vector<8x1xi32>
    %c0_9 = arith.constant 0 : index
    %c0_10 = arith.constant 0 : index
    %8 = vector.load %arg5[%c0_9, %c0_10] : memref<1x128xf32, #tpu.memory_space<vmem>>, vector<1x128xf32>
    %9 = vector.shape_cast %8 : vector<1x128xf32> to vector<1x128xf32>
    %10 = vector.broadcast %9 : vector<1x128xf32> to vector<8x128xf32>
    %cst_11 = arith.constant 0.000000e+00 : f32
    %11 = vector.broadcast %cst_11 : f32 to vector<8x128xf32>
    %c0_i32 = arith.constant 0 : i32
    %c8_i32 = arith.constant 8 : i32
    %12 = arith.muli %c0_i32, %c8_i32 : i32
    %13 = tpu.assume_multiple %12, 8 : i32
    %14 = arith.index_cast %13 : i32 to index
    %c0_12 = arith.constant 0 : index
    %15 = vector.load %arg8[%14, %c0_12] : memref<64x384xf32, #tpu.memory_space<vmem>>, vector<8x384xf32>
    %16 = arith.truncf %11 : vector<8x128xf32> to vector<8x128xbf16>
    %c0_13 = arith.constant 0 : index
    %c0_14 = arith.constant 0 : index
    %17 = vector.load %arg3[%c0_13, %c0_14] : memref<128x384xbf16, #tpu.memory_space<vmem>>, vector<128x384xbf16>
    %cst_15 = arith.constant dense<0.000000e+00> : vector<8x384xf32>
    %18 = tpu.matmul %16, %17, %cst_15 {dimension_numbers = #tpu.dot_dimension_numbers<[1], [0], [0], [1], [0, 0, 1, 1], [], []>} : vector<8x128xbf16>, vector<128x384xbf16>, vector<8x384xf32> -> vector<8x384xf32>
    %19 = vector.extract_strided_slice %15 {offsets = [0, 0], sizes = [8, 128], strides = [1, 1]} : vector<8x384xf32> to vector<8x128xf32>
    %20 = vector.extract_strided_slice %18 {offsets = [0, 0], sizes = [8, 128], strides = [1, 1]} : vector<8x384xf32> to vector<8x128xf32>
    %21 = arith.addf %19, %20 : vector<8x128xf32>
    %22 = arith.negf %21 : vector<8x128xf32>
    %23 = math.exp %22 : vector<8x128xf32>
    %cst_16 = arith.constant 1.000000e+00 : f32
    %24 = vector.broadcast %cst_16 : f32 to vector<8x128xf32>
    %25 = arith.addf %24, %23 : vector<8x128xf32>
    %26 = arith.divf %24, %25 : vector<8x128xf32>
    %27 = vector.extract_strided_slice %15 {offsets = [0, 128], sizes = [8, 128], strides = [1, 1]} : vector<8x384xf32> to vector<8x128xf32>
    %28 = vector.extract_strided_slice %18 {offsets = [0, 128], sizes = [8, 128], strides = [1, 1]} : vector<8x384xf32> to vector<8x128xf32>
    %29 = arith.addf %27, %28 : vector<8x128xf32>
    %30 = arith.negf %29 : vector<8x128xf32>
    %31 = math.exp %30 : vector<8x128xf32>
    %cst_17 = arith.constant 1.000000e+00 : f32
    %32 = vector.broadcast %cst_17 : f32 to vector<8x128xf32>
    %33 = arith.addf %32, %31 : vector<8x128xf32>
    %34 = arith.divf %32, %33 : vector<8x128xf32>
    %35 = vector.extract_strided_slice %15 {offsets = [0, 256], sizes = [8, 128], strides = [1, 1]} : vector<8x384xf32> to vector<8x128xf32>
    %36 = vector.extract_strided_slice %18 {offsets = [0, 256], sizes = [8, 128], strides = [1, 1]} : vector<8x384xf32> to vector<8x128xf32>
    %37 = arith.addf %36, %10 : vector<8x128xf32>
    %38 = arith.mulf %26, %37 : vector<8x128xf32>
    %39 = arith.addf %35, %38 : vector<8x128xf32>
    %40 = math.tanh %39 : vector<8x128xf32>
    %41 = arith.subf %11, %40 : vector<8x128xf32>
    %42 = arith.mulf %34, %41 : vector<8x128xf32>
    %43 = arith.addf %40, %42 : vector<8x128xf32>
    %44 = vector.broadcast %c0_i32 : i32 to vector<8x1xi32>
    %45 = arith.cmpi sgt, %7, %44 : vector<8x1xi32>
    %cst_18 = arith.constant 0.000000e+00 : f32
    %46 = vector.shape_cast %45 : vector<8x1xi1> to vector<8x1xi1>
    %47 = vector.broadcast %46 : vector<8x1xi1> to vector<8x128xi1>
    %48 = vector.broadcast %cst_18 : f32 to vector<8x128xf32>
    %49 = arith.select %47, %43, %48 : vector<8x128xi1>, vector<8x128xf32>
    %50 = arith.index_cast %13 : i32 to index
    %c0_19 = arith.constant 0 : index
    %51 = vector.load %arg6[%50, %c0_19] : memref<64x128xf32, #tpu.memory_space<vmem>>, vector<8x128xf32>
    tpu.vector_store %arg6[%50, %c0_19], %49 {strides = array<i32>} : memref<64x128xf32, #tpu.memory_space<vmem>>, vector<8x128xf32>,
    %52 = vector.shape_cast %45 : vector<8x1xi1> to vector<8x1xi1>
    %53 = vector.broadcast %52 : vector<8x1xi1> to vector<8x128xi1>
    %54 = arith.select %53, %43, %11 : vector<8x128xi1>, vector<8x128xf32>
    %c1_i32 = arith.constant 1 : i32
    %c8_i32_20 = arith.constant 8 : i32
    %55 = arith.muli %c1_i32, %c8_i32_20 : i32
    %56 = tpu.assume_multiple %55, 8 : i32
    %57 = arith.index_cast %56 : i32 to index
    %c0_21 = arith.constant 0 : index
    %58 = vector.load %arg8[%57, %c0_21] : memref<64x384xf32, #tpu.memory_space<vmem>>, vector<8x384xf32>
    %59 = arith.truncf %54 : vector<8x128xf32> to vector<8x128xbf16>
    %c0_22 = arith.constant 0 : index
    %c0_23 = arith.constant 0 : index
    %60 = vector.load %arg3[%c0_22, %c0_23] : memref<128x384xbf16, #tpu.memory_space<vmem>>, vector<128x384xbf16>
    %cst_24 = arith.constant dense<0.000000e+00> : vector<8x384xf32>
    %61 = tpu.matmul %59, %60, %cst_24 {dimension_numbers = #tpu.dot_dimension_numbers<[1], [0], [0], [1], [0, 0, 1, 1], [], []>} : vector<8x128xbf16>, vector<128x384xbf16>, vector<8x384xf32> -> vector<8x384xf32>
    %62 = vector.extract_strided_slice %58 {offsets = [0, 0], sizes = [8, 128], strides = [1, 1]} : vector<8x384xf32> to vector<8x128xf32>
    %63 = vector.extract_strided_slice %61 {offsets = [0, 0], sizes = [8, 128], strides = [1, 1]} : vector<8x384xf32> to vector<8x128xf32>
    %64 = arith.addf %62, %63 : vector<8x128xf32>
    %65 = arith.negf %64 : vector<8x128xf32>
    %66 = math.exp %65 : vector<8x128xf32>
    %cst_25 = arith.constant 1.000000e+00 : f32
    %67 = vector.broadcast %cst_25 : f32 to vector<8x128xf32>
    %68 = arith.addf %67, %66 : vector<8x128xf32>
    %69 = arith.divf %67, %68 : vector<8x128xf32>
    %70 = vector.extract_strided_slice %58 {offsets = [0, 128], sizes = [8, 128], strides = [1, 1]} : vector<8x384xf32> to vector<8x128xf32>
    %71 = vector.extract_strided_slice %61 {offsets = [0, 128], sizes = [8, 128], strides = [1, 1]} : vector<8x384xf32> to vector<8x128xf32>
    %72 = arith.addf %70, %71 : vector<8x128xf32>
    %73 = arith.negf %72 : vector<8x128xf32>
    %74 = math.exp %73 : vector<8x128xf32>
    %cst_26 = arith.constant 1.000000e+00 : f32
    %75 = vector.broadcast %cst_26 : f32 to vector<8x128xf32>
    %76 = arith.addf %75, %74 : vector<8x128xf32>
    %77 = arith.divf %75, %76 : vector<8x128xf32>
    %78 = vector.extract_strided_slice %58 {offsets = [0, 256], sizes = [8, 128], strides = [1, 1]} : vector<8x384xf32> to vector<8x128xf32>
    %79 = vector.extract_strided_slice %61 {offsets = [0, 256], sizes = [8, 128], strides = [1, 1]} : vector<8x384xf32> to vector<8x128xf32>
    %80 = arith.addf %79, %10 : vector<8x128xf32>
    %81 = arith.mulf %69, %80 : vector<8x128xf32>
    %82 = arith.addf %78, %81 : vector<8x128xf32>
    %83 = math.tanh %82 : vector<8x128xf32>
    %84 = arith.subf %54, %83 : vector<8x128xf32>
    %85 = arith.mulf %77, %84 : vector<8x128xf32>
    %86 = arith.addf %83, %85 : vector<8x128xf32>
    %87 = vector.broadcast %c1_i32 : i32 to vector<8x1xi32>
    %88 = arith.cmpi sgt, %7, %87 : vector<8x1xi32>
    %cst_27 = arith.constant 0.000000e+00 : f32
    %89 = vector.shape_cast %88 : vector<8x1xi1> to vector<8x1xi1>
    %90 = vector.broadcast %89 : vector<8x1xi1> to vector<8x128xi1>
    %91 = vector.broadcast %cst_27 : f32 to vector<8x128xf32>
    %92 = arith.select %90, %86, %91 : vector<8x128xi1>, vector<8x128xf32>
    %93 = arith.index_cast %56 : i32 to index
    %c0_28 = arith.constant 0 : index
    %94 = vector.load %arg6[%93, %c0_28] : memref<64x128xf32, #tpu.memory_space<vmem>>, vector<8x128xf32>
    tpu.vector_store %arg6[%93, %c0_28], %92 {strides = array<i32>} : memref<64x128xf32, #tpu.memory_space<vmem>>, vector<8x128xf32>,
    %95 = vector.shape_cast %88 : vector<8x1xi1> to vector<8x1xi1>
    %96 = vector.broadcast %95 : vector<8x1xi1> to vector<8x128xi1>
    %97 = arith.select %96, %86, %54 : vector<8x128xi1>, vector<8x128xf32>
    %c2_i32 = arith.constant 2 : i32
    %c8_i32_29 = arith.constant 8 : i32
    %98 = arith.muli %c2_i32, %c8_i32_29 : i32
    %99 = tpu.assume_multiple %98, 8 : i32
    %100 = arith.index_cast %99 : i32 to index
    %c0_30 = arith.constant 0 : index
    %101 = vector.load %arg8[%100, %c0_30] : memref<64x384xf32, #tpu.memory_space<vmem>>, vector<8x384xf32>
    %102 = arith.truncf %97 : vector<8x128xf32> to vector<8x128xbf16>
    %c0_31 = arith.constant 0 : index
    %c0_32 = arith.constant 0 : index
    %103 = vector.load %arg3[%c0_31, %c0_32] : memref<128x384xbf16, #tpu.memory_space<vmem>>, vector<128x384xbf16>
    %cst_33 = arith.constant dense<0.000000e+00> : vector<8x384xf32>
    %104 = tpu.matmul %102, %103, %cst_33 {dimension_numbers = #tpu.dot_dimension_numbers<[1], [0], [0], [1], [0, 0, 1, 1], [], []>} : vector<8x128xbf16>, vector<128x384xbf16>, vector<8x384xf32> -> vector<8x384xf32>
    %105 = vector.extract_strided_slice %101 {offsets = [0, 0], sizes = [8, 128], strides = [1, 1]} : vector<8x384xf32> to vector<8x128xf32>
    %106 = vector.extract_strided_slice %104 {offsets = [0, 0], sizes = [8, 128], strides = [1, 1]} : vector<8x384xf32> to vector<8x128xf32>
    %107 = arith.addf %105, %106 : vector<8x128xf32>
    %108 = arith.negf %107 : vector<8x128xf32>
    %109 = math.exp %108 : vector<8x128xf32>
    %cst_34 = arith.constant 1.000000e+00 : f32
    %110 = vector.broadcast %cst_34 : f32 to vector<8x128xf32>
    %111 = arith.addf %110, %109 : vector<8x128xf32>
    %112 = arith.divf %110, %111 : vector<8x128xf32>
    %113 = vector.extract_strided_slice %101 {offsets = [0, 128], sizes = [8, 128], strides = [1, 1]} : vector<8x384xf32> to vector<8x128xf32>
    %114 = vector.extract_strided_slice %104 {offsets = [0, 128], sizes = [8, 128], strides = [1, 1]} : vector<8x384xf32> to vector<8x128xf32>
    %115 = arith.addf %113, %114 : vector<8x128xf32>
    %116 = arith.negf %115 : vector<8x128xf32>
    %117 = math.exp %116 : vector<8x128xf32>
    %cst_35 = arith.constant 1.000000e+00 : f32
    %118 = vector.broadcast %cst_35 : f32 to vector<8x128xf32>
    %119 = arith.addf %118, %117 : vector<8x128xf32>
    %120 = arith.divf %118, %119 : vector<8x128xf32>
    %121 = vector.extract_strided_slice %101 {offsets = [0, 256], sizes = [8, 128], strides = [1, 1]} : vector<8x384xf32> to vector<8x128xf32>
    %122 = vector.extract_strided_slice %104 {offsets = [0, 256], sizes = [8, 128], strides = [1, 1]} : vector<8x384xf32> to vector<8x128xf32>
    %123 = arith.addf %122, %10 : vector<8x128xf32>
    %124 = arith.mulf %112, %123 : vector<8x128xf32>
    %125 = arith.addf %121, %124 : vector<8x128xf32>
    %126 = math.tanh %125 : vector<8x128xf32>
    %127 = arith.subf %97, %126 : vector<8x128xf32>
    %128 = arith.mulf %120, %127 : vector<8x128xf32>
    %129 = arith.addf %126, %128 : vector<8x128xf32>
    %130 = vector.broadcast %c2_i32 : i32 to vector<8x1xi32>
    %131 = arith.cmpi sgt, %7, %130 : vector<8x1xi32>
    %cst_36 = arith.constant 0.000000e+00 : f32
    %132 = vector.shape_cast %131 : vector<8x1xi1> to vector<8x1xi1>
    %133 = vector.broadcast %132 : vector<8x1xi1> to vector<8x128xi1>
    %134 = vector.broadcast %cst_36 : f32 to vector<8x128xf32>
    %135 = arith.select %133, %129, %134 : vector<8x128xi1>, vector<8x128xf32>
    %136 = arith.index_cast %99 : i32 to index
    %c0_37 = arith.constant 0 : index
    %137 = vector.load %arg6[%136, %c0_37] : memref<64x128xf32, #tpu.memory_space<vmem>>, vector<8x128xf32>
    tpu.vector_store %arg6[%136, %c0_37], %135 {strides = array<i32>} : memref<64x128xf32, #tpu.memory_space<vmem>>, vector<8x128xf32>,
    %138 = vector.shape_cast %131 : vector<8x1xi1> to vector<8x1xi1>
    %139 = vector.broadcast %138 : vector<8x1xi1> to vector<8x128xi1>
    %140 = arith.select %139, %129, %97 : vector<8x128xi1>, vector<8x128xf32>
    %c3_i32 = arith.constant 3 : i32
    %c8_i32_38 = arith.constant 8 : i32
    %141 = arith.muli %c3_i32, %c8_i32_38 : i32
    %142 = tpu.assume_multiple %141, 8 : i32
    %143 = arith.index_cast %142 : i32 to index
    %c0_39 = arith.constant 0 : index
    %144 = vector.load %arg8[%143, %c0_39] : memref<64x384xf32, #tpu.memory_space<vmem>>, vector<8x384xf32>
    %145 = arith.truncf %140 : vector<8x128xf32> to vector<8x128xbf16>
    %c0_40 = arith.constant 0 : index
    %c0_41 = arith.constant 0 : index
    %146 = vector.load %arg3[%c0_40, %c0_41] : memref<128x384xbf16, #tpu.memory_space<vmem>>, vector<128x384xbf16>
    %cst_42 = arith.constant dense<0.000000e+00> : vector<8x384xf32>
    %147 = tpu.matmul %145, %146, %cst_42 {dimension_numbers = #tpu.dot_dimension_numbers<[1], [0], [0], [1], [0, 0, 1, 1], [], []>} : vector<8x128xbf16>, vector<128x384xbf16>, vector<8x384xf32> -> vector<8x384xf32>
    %148 = vector.extract_strided_slice %144 {offsets = [0, 0], sizes = [8, 128], strides = [1, 1]} : vector<8x384xf32> to vector<8x128xf32>
    %149 = vector.extract_strided_slice %147 {offsets = [0, 0], sizes = [8, 128], strides = [1, 1]} : vector<8x384xf32> to vector<8x128xf32>
    %150 = arith.addf %148, %149 : vector<8x128xf32>
    %151 = arith.negf %150 : vector<8x128xf32>
    %152 = math.exp %151 : vector<8x128xf32>
    %cst_43 = arith.constant 1.000000e+00 : f32
    %153 = vector.broadcast %cst_43 : f32 to vector<8x128xf32>
    %154 = arith.addf %153, %152 : vector<8x128xf32>
    %155 = arith.divf %153, %154 : vector<8x128xf32>
    %156 = vector.extract_strided_slice %144 {offsets = [0, 128], sizes = [8, 128], strides = [1, 1]} : vector<8x384xf32> to vector<8x128xf32>
    %157 = vector.extract_strided_slice %147 {offsets = [0, 128], sizes = [8, 128], strides = [1, 1]} : vector<8x384xf32> to vector<8x128xf32>
    %158 = arith.addf %156, %157 : vector<8x128xf32>
    %159 = arith.negf %158 : vector<8x128xf32>
    %160 = math.exp %159 : vector<8x128xf32>
    %cst_44 = arith.constant 1.000000e+00 : f32
    %161 = vector.broadcast %cst_44 : f32 to vector<8x128xf32>
    %162 = arith.addf %161, %160 : vector<8x128xf32>
    %163 = arith.divf %161, %162 : vector<8x128xf32>
    %164 = vector.extract_strided_slice %144 {offsets = [0, 256], sizes = [8, 128], strides = [1, 1]} : vector<8x384xf32> to vector<8x128xf32>
    %165 = vector.extract_strided_slice %147 {offsets = [0, 256], sizes = [8, 128], strides = [1, 1]} : vector<8x384xf32> to vector<8x128xf32>
    %166 = arith.addf %165, %10 : vector<8x128xf32>
    %167 = arith.mulf %155, %166 : vector<8x128xf32>
    %168 = arith.addf %164, %167 : vector<8x128xf32>
    %169 = math.tanh %168 : vector<8x128xf32>
    %170 = arith.subf %140, %169 : vector<8x128xf32>
    %171 = arith.mulf %163, %170 : vector<8x128xf32>
    %172 = arith.addf %169, %171 : vector<8x128xf32>
    %173 = vector.broadcast %c3_i32 : i32 to vector<8x1xi32>
    %174 = arith.cmpi sgt, %7, %173 : vector<8x1xi32>
    %cst_45 = arith.constant 0.000000e+00 : f32
    %175 = vector.shape_cast %174 : vector<8x1xi1> to vector<8x1xi1>
    %176 = vector.broadcast %175 : vector<8x1xi1> to vector<8x128xi1>
    %177 = vector.broadcast %cst_45 : f32 to vector<8x128xf32>
    %178 = arith.select %176, %172, %177 : vector<8x128xi1>, vector<8x128xf32>
    %179 = arith.index_cast %142 : i32 to index
    %c0_46 = arith.constant 0 : index
    %180 = vector.load %arg6[%179, %c0_46] : memref<64x128xf32, #tpu.memory_space<vmem>>, vector<8x128xf32>
    tpu.vector_store %arg6[%179, %c0_46], %178 {strides = array<i32>} : memref<64x128xf32, #tpu.memory_space<vmem>>, vector<8x128xf32>,
    %181 = vector.shape_cast %174 : vector<8x1xi1> to vector<8x1xi1>
    %182 = vector.broadcast %181 : vector<8x1xi1> to vector<8x128xi1>
    %183 = arith.select %182, %172, %140 : vector<8x128xi1>, vector<8x128xf32>
    %c4_i32 = arith.constant 4 : i32
    %c8_i32_47 = arith.constant 8 : i32
    %184 = arith.muli %c4_i32, %c8_i32_47 : i32
    %185 = tpu.assume_multiple %184, 8 : i32
    %186 = arith.index_cast %185 : i32 to index
    %c0_48 = arith.constant 0 : index
    %187 = vector.load %arg8[%186, %c0_48] : memref<64x384xf32, #tpu.memory_space<vmem>>, vector<8x384xf32>
    %188 = arith.truncf %183 : vector<8x128xf32> to vector<8x128xbf16>
    %c0_49 = arith.constant 0 : index
    %c0_50 = arith.constant 0 : index
    %189 = vector.load %arg3[%c0_49, %c0_50] : memref<128x384xbf16, #tpu.memory_space<vmem>>, vector<128x384xbf16>
    %cst_51 = arith.constant dense<0.000000e+00> : vector<8x384xf32>
    %190 = tpu.matmul %188, %189, %cst_51 {dimension_numbers = #tpu.dot_dimension_numbers<[1], [0], [0], [1], [0, 0, 1, 1], [], []>} : vector<8x128xbf16>, vector<128x384xbf16>, vector<8x384xf32> -> vector<8x384xf32>
    %191 = vector.extract_strided_slice %187 {offsets = [0, 0], sizes = [8, 128], strides = [1, 1]} : vector<8x384xf32> to vector<8x128xf32>
    %192 = vector.extract_strided_slice %190 {offsets = [0, 0], sizes = [8, 128], strides = [1, 1]} : vector<8x384xf32> to vector<8x128xf32>
    %193 = arith.addf %191, %192 : vector<8x128xf32>
    %194 = arith.negf %193 : vector<8x128xf32>
    %195 = math.exp %194 : vector<8x128xf32>
    %cst_52 = arith.constant 1.000000e+00 : f32
    %196 = vector.broadcast %cst_52 : f32 to vector<8x128xf32>
    %197 = arith.addf %196, %195 : vector<8x128xf32>
    %198 = arith.divf %196, %197 : vector<8x128xf32>
    %199 = vector.extract_strided_slice %187 {offsets = [0, 128], sizes = [8, 128], strides = [1, 1]} : vector<8x384xf32> to vector<8x128xf32>
    %200 = vector.extract_strided_slice %190 {offsets = [0, 128], sizes = [8, 128], strides = [1, 1]} : vector<8x384xf32> to vector<8x128xf32>
    %201 = arith.addf %199, %200 : vector<8x128xf32>
    %202 = arith.negf %201 : vector<8x128xf32>
    %203 = math.exp %202 : vector<8x128xf32>
    %cst_53 = arith.constant 1.000000e+00 : f32
    %204 = vector.broadcast %cst_53 : f32 to vector<8x128xf32>
    %205 = arith.addf %204, %203 : vector<8x128xf32>
    %206 = arith.divf %204, %205 : vector<8x128xf32>
    %207 = vector.extract_strided_slice %187 {offsets = [0, 256], sizes = [8, 128], strides = [1, 1]} : vector<8x384xf32> to vector<8x128xf32>
    %208 = vector.extract_strided_slice %190 {offsets = [0, 256], sizes = [8, 128], strides = [1, 1]} : vector<8x384xf32> to vector<8x128xf32>
    %209 = arith.addf %208, %10 : vector<8x128xf32>
    %210 = arith.mulf %198, %209 : vector<8x128xf32>
    %211 = arith.addf %207, %210 : vector<8x128xf32>
    %212 = math.tanh %211 : vector<8x128xf32>
    %213 = arith.subf %183, %212 : vector<8x128xf32>
    %214 = arith.mulf %206, %213 : vector<8x128xf32>
    %215 = arith.addf %212, %214 : vector<8x128xf32>
    %216 = vector.broadcast %c4_i32 : i32 to vector<8x1xi32>
    %217 = arith.cmpi sgt, %7, %216 : vector<8x1xi32>
    %cst_54 = arith.constant 0.000000e+00 : f32
    %218 = vector.shape_cast %217 : vector<8x1xi1> to vector<8x1xi1>
    %219 = vector.broadcast %218 : vector<8x1xi1> to vector<8x128xi1>
    %220 = vector.broadcast %cst_54 : f32 to vector<8x128xf32>
    %221 = arith.select %219, %215, %220 : vector<8x128xi1>, vector<8x128xf32>
    %222 = arith.index_cast %185 : i32 to index
    %c0_55 = arith.constant 0 : index
    %223 = vector.load %arg6[%222, %c0_55] : memref<64x128xf32, #tpu.memory_space<vmem>>, vector<8x128xf32>
    tpu.vector_store %arg6[%222, %c0_55], %221 {strides = array<i32>} : memref<64x128xf32, #tpu.memory_space<vmem>>, vector<8x128xf32>,
    %224 = vector.shape_cast %217 : vector<8x1xi1> to vector<8x1xi1>
    %225 = vector.broadcast %224 : vector<8x1xi1> to vector<8x128xi1>
    %226 = arith.select %225, %215, %183 : vector<8x128xi1>, vector<8x128xf32>
    %c5_i32 = arith.constant 5 : i32
    %c8_i32_56 = arith.constant 8 : i32
    %227 = arith.muli %c5_i32, %c8_i32_56 : i32
    %228 = tpu.assume_multiple %227, 8 : i32
    %229 = arith.index_cast %228 : i32 to index
    %c0_57 = arith.constant 0 : index
    %230 = vector.load %arg8[%229, %c0_57] : memref<64x384xf32, #tpu.memory_space<vmem>>, vector<8x384xf32>
    %231 = arith.truncf %226 : vector<8x128xf32> to vector<8x128xbf16>
    %c0_58 = arith.constant 0 : index
    %c0_59 = arith.constant 0 : index
    %232 = vector.load %arg3[%c0_58, %c0_59] : memref<128x384xbf16, #tpu.memory_space<vmem>>, vector<128x384xbf16>
    %cst_60 = arith.constant dense<0.000000e+00> : vector<8x384xf32>
    %233 = tpu.matmul %231, %232, %cst_60 {dimension_numbers = #tpu.dot_dimension_numbers<[1], [0], [0], [1], [0, 0, 1, 1], [], []>} : vector<8x128xbf16>, vector<128x384xbf16>, vector<8x384xf32> -> vector<8x384xf32>
    %234 = vector.extract_strided_slice %230 {offsets = [0, 0], sizes = [8, 128], strides = [1, 1]} : vector<8x384xf32> to vector<8x128xf32>
    %235 = vector.extract_strided_slice %233 {offsets = [0, 0], sizes = [8, 128], strides = [1, 1]} : vector<8x384xf32> to vector<8x128xf32>
    %236 = arith.addf %234, %235 : vector<8x128xf32>
    %237 = arith.negf %236 : vector<8x128xf32>
    %238 = math.exp %237 : vector<8x128xf32>
    %cst_61 = arith.constant 1.000000e+00 : f32
    %239 = vector.broadcast %cst_61 : f32 to vector<8x128xf32>
    %240 = arith.addf %239, %238 : vector<8x128xf32>
    %241 = arith.divf %239, %240 : vector<8x128xf32>
    %242 = vector.extract_strided_slice %230 {offsets = [0, 128], sizes = [8, 128], strides = [1, 1]} : vector<8x384xf32> to vector<8x128xf32>
    %243 = vector.extract_strided_slice %233 {offsets = [0, 128], sizes = [8, 128], strides = [1, 1]} : vector<8x384xf32> to vector<8x128xf32>
    %244 = arith.addf %242, %243 : vector<8x128xf32>
    %245 = arith.negf %244 : vector<8x128xf32>
    %246 = math.exp %245 : vector<8x128xf32>
    %cst_62 = arith.constant 1.000000e+00 : f32
    %247 = vector.broadcast %cst_62 : f32 to vector<8x128xf32>
    %248 = arith.addf %247, %246 : vector<8x128xf32>
    %249 = arith.divf %247, %248 : vector<8x128xf32>
    %250 = vector.extract_strided_slice %230 {offsets = [0, 256], sizes = [8, 128], strides = [1, 1]} : vector<8x384xf32> to vector<8x128xf32>
    %251 = vector.extract_strided_slice %233 {offsets = [0, 256], sizes = [8, 128], strides = [1, 1]} : vector<8x384xf32> to vector<8x128xf32>
    %252 = arith.addf %251, %10 : vector<8x128xf32>
    %253 = arith.mulf %241, %252 : vector<8x128xf32>
    %254 = arith.addf %250, %253 : vector<8x128xf32>
    %255 = math.tanh %254 : vector<8x128xf32>
    %256 = arith.subf %226, %255 : vector<8x128xf32>
    %257 = arith.mulf %249, %256 : vector<8x128xf32>
    %258 = arith.addf %255, %257 : vector<8x128xf32>
    %259 = vector.broadcast %c5_i32 : i32 to vector<8x1xi32>
    %260 = arith.cmpi sgt, %7, %259 : vector<8x1xi32>
    %cst_63 = arith.constant 0.000000e+00 : f32
    %261 = vector.shape_cast %260 : vector<8x1xi1> to vector<8x1xi1>
    %262 = vector.broadcast %261 : vector<8x1xi1> to vector<8x128xi1>
    %263 = vector.broadcast %cst_63 : f32 to vector<8x128xf32>
    %264 = arith.select %262, %258, %263 : vector<8x128xi1>, vector<8x128xf32>
    %265 = arith.index_cast %228 : i32 to index
    %c0_64 = arith.constant 0 : index
    %266 = vector.load %arg6[%265, %c0_64] : memref<64x128xf32, #tpu.memory_space<vmem>>, vector<8x128xf32>
    tpu.vector_store %arg6[%265, %c0_64], %264 {strides = array<i32>} : memref<64x128xf32, #tpu.memory_space<vmem>>, vector<8x128xf32>,
    %267 = vector.shape_cast %260 : vector<8x1xi1> to vector<8x1xi1>
    %268 = vector.broadcast %267 : vector<8x1xi1> to vector<8x128xi1>
    %269 = arith.select %268, %258, %226 : vector<8x128xi1>, vector<8x128xf32>
    %c6_i32 = arith.constant 6 : i32
    %c8_i32_65 = arith.constant 8 : i32
    %270 = arith.muli %c6_i32, %c8_i32_65 : i32
    %271 = tpu.assume_multiple %270, 8 : i32
    %272 = arith.index_cast %271 : i32 to index
    %c0_66 = arith.constant 0 : index
    %273 = vector.load %arg8[%272, %c0_66] : memref<64x384xf32, #tpu.memory_space<vmem>>, vector<8x384xf32>
    %274 = arith.truncf %269 : vector<8x128xf32> to vector<8x128xbf16>
    %c0_67 = arith.constant 0 : index
    %c0_68 = arith.constant 0 : index
    %275 = vector.load %arg3[%c0_67, %c0_68] : memref<128x384xbf16, #tpu.memory_space<vmem>>, vector<128x384xbf16>
    %cst_69 = arith.constant dense<0.000000e+00> : vector<8x384xf32>
    %276 = tpu.matmul %274, %275, %cst_69 {dimension_numbers = #tpu.dot_dimension_numbers<[1], [0], [0], [1], [0, 0, 1, 1], [], []>} : vector<8x128xbf16>, vector<128x384xbf16>, vector<8x384xf32> -> vector<8x384xf32>
    %277 = vector.extract_strided_slice %273 {offsets = [0, 0], sizes = [8, 128], strides = [1, 1]} : vector<8x384xf32> to vector<8x128xf32>
    %278 = vector.extract_strided_slice %276 {offsets = [0, 0], sizes = [8, 128], strides = [1, 1]} : vector<8x384xf32> to vector<8x128xf32>
    %279 = arith.addf %277, %278 : vector<8x128xf32>
    %280 = arith.negf %279 : vector<8x128xf32>
    %281 = math.exp %280 : vector<8x128xf32>
    %cst_70 = arith.constant 1.000000e+00 : f32
    %282 = vector.broadcast %cst_70 : f32 to vector<8x128xf32>
    %283 = arith.addf %282, %281 : vector<8x128xf32>
    %284 = arith.divf %282, %283 : vector<8x128xf32>
    %285 = vector.extract_strided_slice %273 {offsets = [0, 128], sizes = [8, 128], strides = [1, 1]} : vector<8x384xf32> to vector<8x128xf32>
    %286 = vector.extract_strided_slice %276 {offsets = [0, 128], sizes = [8, 128], strides = [1, 1]} : vector<8x384xf32> to vector<8x128xf32>
    %287 = arith.addf %285, %286 : vector<8x128xf32>
    %288 = arith.negf %287 : vector<8x128xf32>
    %289 = math.exp %288 : vector<8x128xf32>
    %cst_71 = arith.constant 1.000000e+00 : f32
    %290 = vector.broadcast %cst_71 : f32 to vector<8x128xf32>
    %291 = arith.addf %290, %289 : vector<8x128xf32>
    %292 = arith.divf %290, %291 : vector<8x128xf32>
    %293 = vector.extract_strided_slice %273 {offsets = [0, 256], sizes = [8, 128], strides = [1, 1]} : vector<8x384xf32> to vector<8x128xf32>
    %294 = vector.extract_strided_slice %276 {offsets = [0, 256], sizes = [8, 128], strides = [1, 1]} : vector<8x384xf32> to vector<8x128xf32>
    %295 = arith.addf %294, %10 : vector<8x128xf32>
    %296 = arith.mulf %284, %295 : vector<8x128xf32>
    %297 = arith.addf %293, %296 : vector<8x128xf32>
    %298 = math.tanh %297 : vector<8x128xf32>
    %299 = arith.subf %269, %298 : vector<8x128xf32>
    %300 = arith.mulf %292, %299 : vector<8x128xf32>
    %301 = arith.addf %298, %300 : vector<8x128xf32>
    %302 = vector.broadcast %c6_i32 : i32 to vector<8x1xi32>
    %303 = arith.cmpi sgt, %7, %302 : vector<8x1xi32>
    %cst_72 = arith.constant 0.000000e+00 : f32
    %304 = vector.shape_cast %303 : vector<8x1xi1> to vector<8x1xi1>
    %305 = vector.broadcast %304 : vector<8x1xi1> to vector<8x128xi1>
    %306 = vector.broadcast %cst_72 : f32 to vector<8x128xf32>
    %307 = arith.select %305, %301, %306 : vector<8x128xi1>, vector<8x128xf32>
    %308 = arith.index_cast %271 : i32 to index
    %c0_73 = arith.constant 0 : index
    %309 = vector.load %arg6[%308, %c0_73] : memref<64x128xf32, #tpu.memory_space<vmem>>, vector<8x128xf32>
    tpu.vector_store %arg6[%308, %c0_73], %307 {strides = array<i32>} : memref<64x128xf32, #tpu.memory_space<vmem>>, vector<8x128xf32>,
    %310 = vector.shape_cast %303 : vector<8x1xi1> to vector<8x1xi1>
    %311 = vector.broadcast %310 : vector<8x1xi1> to vector<8x128xi1>
    %312 = arith.select %311, %301, %269 : vector<8x128xi1>, vector<8x128xf32>
    %c7_i32 = arith.constant 7 : i32
    %c8_i32_74 = arith.constant 8 : i32
    %313 = arith.muli %c7_i32, %c8_i32_74 : i32
    %314 = tpu.assume_multiple %313, 8 : i32
    %315 = arith.index_cast %314 : i32 to index
    %c0_75 = arith.constant 0 : index
    %316 = vector.load %arg8[%315, %c0_75] : memref<64x384xf32, #tpu.memory_space<vmem>>, vector<8x384xf32>
    %317 = arith.truncf %312 : vector<8x128xf32> to vector<8x128xbf16>
    %c0_76 = arith.constant 0 : index
    %c0_77 = arith.constant 0 : index
    %318 = vector.load %arg3[%c0_76, %c0_77] : memref<128x384xbf16, #tpu.memory_space<vmem>>, vector<128x384xbf16>
    %cst_78 = arith.constant dense<0.000000e+00> : vector<8x384xf32>
    %319 = tpu.matmul %317, %318, %cst_78 {dimension_numbers = #tpu.dot_dimension_numbers<[1], [0], [0], [1], [0, 0, 1, 1], [], []>} : vector<8x128xbf16>, vector<128x384xbf16>, vector<8x384xf32> -> vector<8x384xf32>
    %320 = vector.extract_strided_slice %316 {offsets = [0, 0], sizes = [8, 128], strides = [1, 1]} : vector<8x384xf32> to vector<8x128xf32>
    %321 = vector.extract_strided_slice %319 {offsets = [0, 0], sizes = [8, 128], strides = [1, 1]} : vector<8x384xf32> to vector<8x128xf32>
    %322 = arith.addf %320, %321 : vector<8x128xf32>
    %323 = arith.negf %322 : vector<8x128xf32>
    %324 = math.exp %323 : vector<8x128xf32>
    %cst_79 = arith.constant 1.000000e+00 : f32
    %325 = vector.broadcast %cst_79 : f32 to vector<8x128xf32>
    %326 = arith.addf %325, %324 : vector<8x128xf32>
    %327 = arith.divf %325, %326 : vector<8x128xf32>
    %328 = vector.extract_strided_slice %316 {offsets = [0, 128], sizes = [8, 128], strides = [1, 1]} : vector<8x384xf32> to vector<8x128xf32>
    %329 = vector.extract_strided_slice %319 {offsets = [0, 128], sizes = [8, 128], strides = [1, 1]} : vector<8x384xf32> to vector<8x128xf32>
    %330 = arith.addf %328, %329 : vector<8x128xf32>
    %331 = arith.negf %330 : vector<8x128xf32>
    %332 = math.exp %331 : vector<8x128xf32>
    %cst_80 = arith.constant 1.000000e+00 : f32
    %333 = vector.broadcast %cst_80 : f32 to vector<8x128xf32>
    %334 = arith.addf %333, %332 : vector<8x128xf32>
    %335 = arith.divf %333, %334 : vector<8x128xf32>
    %336 = vector.extract_strided_slice %316 {offsets = [0, 256], sizes = [8, 128], strides = [1, 1]} : vector<8x384xf32> to vector<8x128xf32>
    %337 = vector.extract_strided_slice %319 {offsets = [0, 256], sizes = [8, 128], strides = [1, 1]} : vector<8x384xf32> to vector<8x128xf32>
    %338 = arith.addf %337, %10 : vector<8x128xf32>
    %339 = arith.mulf %327, %338 : vector<8x128xf32>
    %340 = arith.addf %336, %339 : vector<8x128xf32>
    %341 = math.tanh %340 : vector<8x128xf32>
    %342 = arith.subf %312, %341 : vector<8x128xf32>
    %343 = arith.mulf %335, %342 : vector<8x128xf32>
    %344 = arith.addf %341, %343 : vector<8x128xf32>
    %345 = vector.broadcast %c7_i32 : i32 to vector<8x1xi32>
    %346 = arith.cmpi sgt, %7, %345 : vector<8x1xi32>
    %cst_81 = arith.constant 0.000000e+00 : f32
    %347 = vector.shape_cast %346 : vector<8x1xi1> to vector<8x1xi1>
    %348 = vector.broadcast %347 : vector<8x1xi1> to vector<8x128xi1>
    %349 = vector.broadcast %cst_81 : f32 to vector<8x128xf32>
    %350 = arith.select %348, %344, %349 : vector<8x128xi1>, vector<8x128xf32>
    %351 = arith.index_cast %314 : i32 to index
    %c0_82 = arith.constant 0 : index
    %352 = vector.load %arg6[%351, %c0_82] : memref<64x128xf32, #tpu.memory_space<vmem>>, vector<8x128xf32>
    tpu.vector_store %arg6[%351, %c0_82], %350 {strides = array<i32>} : memref<64x128xf32, #tpu.memory_space<vmem>>, vector<8x128xf32>,
    %353 = vector.shape_cast %346 : vector<8x1xi1> to vector<8x1xi1>
    %354 = vector.broadcast %353 : vector<8x1xi1> to vector<8x128xi1>
    %355 = arith.select %354, %344, %312 : vector<8x128xi1>, vector<8x128xf32>
    %c8_i32_83 = arith.constant 8 : i32
    %c0_84 = arith.constant 0 : index
    %c0_85 = arith.constant 0 : index
    %356 = vector.load %arg7[%c0_84, %c0_85] : memref<8x128xf32, #tpu.memory_space<vmem>>, vector<8x128xf32>
    tpu.vector_store %arg7[%c0_84, %c0_85], %355 {strides = array<i32>} : memref<8x128xf32, #tpu.memory_space<vmem>>, vector<8x128xf32>,
    return
  }
}

</mosaic_0001>

<llo_original>
// kernel: tpu_custom_call.1
$region0: #{tpu_custom_call.1}
  #allocation0 [shape = 'u32[]', space=smem, size = 0x4, offset = 0x4, fixed_abs, tag = 'smem constant byte address 0x4 - core index']
  #allocation1 [shape = 'u32[144,128]{1,0:T(1,128)}', space=vmem, size = 0x12000, scoped, tag = 'internal scratch']
  #allocation2 [shape = 'f32[64,384]{1,0:T(8,128)}', space=vmem, size = 0x18000, scoped, tag = 'scratch operand']
  %s0 = inlined_call_operand.vmem [shape: bf16[64,16], index: 0, kind: input, shape index: {}]
  %s1 = inlined_call_operand.vmem [shape: s32[8,1], index: 1, kind: input, shape index: {}]
  %s2 = inlined_call_operand.vmem [shape: bf16[16,384], index: 2, kind: input, shape index: {}]
  %s3 = inlined_call_operand.hbm [shape: bf16[128,384], index: 3, kind: input, shape index: {}]
  %s4 = inlined_call_operand.vmem [shape: f32[1,384], index: 4, kind: input, shape index: {}]
  %s5 = inlined_call_operand.vmem [shape: f32[1,128], index: 5, kind: input, shape index: {}]
  %s6 = inlined_call_operand.hbm [shape: f32[64,128], index: 6, kind: output, shape index: {0}]
  %s7 = inlined_call_operand.hbm [shape: f32[8,128], index: 7, kind: output, shape index: {1}]
  %8 = xla_tuple %s6, %s7
  %s9 = sld [smem:[#allocation0]]
  $region46: #{tpu_custom_call.1} parent=0
    _
  %s11 = ssub.s32 1, %s9
  %s12 = scalar_select 0, %s11, %s9
  $region1: #{tpu_custom_call.1} parent=0
    #allocation3 [shape = 'u8[98304]{0}', space=vmem, size = 0x18000, scoped, tag = 'input window, operand 3, single buffered']
    #allocation4 [shape = 's32[1]{0}', space=sflag, size = 0x4, scoped, tag = 'scoped memory for tpu_custom_call.1']
    #allocation5 [shape = 's32[1]{0}', space=sflag, size = 0x4, scoped, tag = 'scoped memory for tpu_custom_call.1']
    #allocation6 [shape = 'u8[32768]{0}', space=vmem, size = 0x8000, scoped, tag = 'output window, operand 0, single buffered']
    #allocation7 [shape = 'u8[4096]{0}', space=vmem, size = 0x1000, scoped, tag = 'output window, operand 1, single buffered']
    #allocation8 [shape = 's32[1]{0}', space=sflag, size = 0x4, scoped, tag = 'scoped memory for tpu_custom_call.1']
    %13 = vsyncpa [#allocation4], 0
    %14 = vsyncpa [#allocation5], 0
    %15 = vsyncpa [#allocation8], 0
    // Predicated region
    $region2: #{tpu_custom_call.1} parent=1 // pred_check
      _
    $region3: #{tpu_custom_call.1} parent=1 // pred_check_branch
      %17 = sbr.rel (0) target = $region5
    $region4: #{tpu_custom_call.1} parent=1 // pred_region
      _
    $region5: #{tpu_custom_call.1} parent=1 // pred_fallthru
      _
    // Predicated region
    $region6: #{tpu_custom_call.1} parent=1 // pred_check
      _
    $region7: #{tpu_custom_call.1} parent=1 // pred_check_branch
      %19 = sbr.rel (0) target = $region9
    $region8: #{tpu_custom_call.1} parent=1 // pred_region
      _
    $region9: #{tpu_custom_call.1} parent=1 // pred_fallthru
      _
    // Predicated region
    $region10: #{tpu_custom_call.1} parent=1 // pred_check
      _
    $region11: #{tpu_custom_call.1} parent=1 // pred_check_branch
      %21 = sbr.rel (0) target = $region13
    $region12: #{tpu_custom_call.1} parent=1 // pred_region
      _
    $region13: #{tpu_custom_call.1} parent=1 // pred_fallthru
      _
    // Predicated region
    $region14: #{tpu_custom_call.1} parent=1 // pred_check
      _
    $region15: #{tpu_custom_call.1} parent=1 // pred_check_branch
      %23 = sbr.rel (0) target = $region17
    $region16: #{tpu_custom_call.1} parent=1 // pred_region
      %s25 = ssub.s32 3072, 3072
      %26 = vsyncadd [#allocation4], %s25
      %s27 = sshll.u32 [#allocation3], 4
      %s28 = int_to_ptr.vmem [resolvable:$true] %s27
      %33 = dma.hbm_to_vmem [thread:$0]  %s3, 3072, %s28, [#allocation4], 192, 192, 12
    $region17: #{tpu_custom_call.1} parent=1 // pred_fallthru
      _
    // Predicated region
    $region18: #{tpu_custom_call.1} parent=1 // pred_check
      _
    $region19: #{tpu_custom_call.1} parent=1 // pred_check_branch
      %35 = sbr.rel (0) target = $region21
    $region20: #{tpu_custom_call.1} parent=1 // pred_region
      _
    $region21: #{tpu_custom_call.1} parent=1 // pred_fallthru
      _
    // Predicated region
    $region22: #{tpu_custom_call.1} parent=1 // pred_check
      _
    $region23: #{tpu_custom_call.1} parent=1 // pred_check_branch
      %37 = sbr.rel (0) target = $region25
    $region24: #{tpu_custom_call.1} parent=1 // pred_region
      _
    $region25: #{tpu_custom_call.1} parent=1 // pred_fallthru
      _
    // Predicated region
    $region26: #{tpu_custom_call.1} parent=1 // pred_check
      _
    $region27: #{tpu_custom_call.1} parent=1 // pred_check_branch
      %39 = sbr.rel (0) target = $region29
    $region28: #{tpu_custom_call.1} parent=1 // pred_region
      %40 = dma.done [#allocation4], 3072
    $region29: #{tpu_custom_call.1} parent=1 // pred_fallthru
      _
    %v42 = vld [vmem:[%s0] sm:$0xf]
    %v43 = vld [vmem:[%s0 + $0x4] sm:$0xf]
    %v44 = vld [vmem:[%s0 + $0x8] sm:$0xf]
    %v45 = vld [vmem:[%s0 + $0xc] sm:$0xf]
    %v46 = vld [vmem:[%s0 + $0x10] sm:$0xf]
    %v47 = vld [vmem:[%s0 + $0x14] sm:$0xf]
    %v48 = vld [vmem:[%s0 + $0x18] sm:$0xf]
    %v49 = vld [vmem:[%s0 + $0x1c] sm:$0xf]
    %v50 = vld [vmem:[%s2] sm:$0xff]
    %v51 = vld [vmem:[%s2 + $0x8] sm:$0xf]
    %v52 = vld [vmem:[%s2 + $0xc] sm:$0xff]
    %v53 = vld [vmem:[%s2 + $0x14] sm:$0xf]
    %v54 = vld [vmem:[%s4] sm:$0x7]
    %v56 = vlaneseq
    %v57 = vshrl.u32 %v56, 7
    %v58 = vsub.s32 0, %v57
    %v59 = vrot.slane %v54, %v58
    %v60 = vlaneseq
    %v61 = vshrl.u32 %v60, 7
    %v62 = vsub.s32 1, %v61
    %v63 = vrot.slane %v54, %v62
    %v64 = vlaneseq
    %v65 = vshrl.u32 %v64, 7
    %v66 = vsub.s32 2, %v65
    %v67 = vrot.slane %v54, %v66
    %v79 = vunpack.c.l.b16 %v42
    %v80 = vunpack.c.l.b16 %v43
    %v81 = vunpack.c.l.b16 %v44
    %v82 = vunpack.c.l.b16 %v45
    %v83 = vunpack.c.l.b16 %v46
    %v84 = vunpack.c.l.b16 %v47
    %v85 = vunpack.c.l.b16 %v48
    %v86 = vunpack.c.l.b16 %v49
    %v87 = vpack.c.b16 %v80, %v79
    %v88 = vpack.c.b16 %v82, %v81
    %v89 = vpack.c.b16 %v84, %v83
    %v90 = vpack.c.b16 %v86, %v85
    %v95 = vunpack.c.l.b16 %v50
    %v96 = vunpack.c.h.b16 %v50
    %v97 = vunpack.c.l.b16 %v51
    %v98 = vunpack.c.l.b16 %v52
    %v99 = vunpack.c.h.b16 %v52
    %v100 = vunpack.c.l.b16 %v53
    %v101 = vpack.c.b16 %v98, %v95
    %v102 = vpack.c.b16 %v99, %v96
    %v103 = vpack.c.b16 %v100, %v97
    %vm107 = vcmask 130048
    %v109 = vsel %vm107, %v87, 0
    %v112 = vsel %vm107, %v88, 0
    %v115 = vsel %vm107, %v89, 0
    %v118 = vsel %vm107, %v90, 0
    %120 = vmatprep.subr.bf16.mxu0 %v102
    %121 = vmatpush1.bf16.msra.mxu0 %v101
    %122 = vmatprep.subr.bf16.mxu0 0
    %123 = vmatpush1.bf16.msra.mxu0 0
    %124 = vmatprep.subr.bf16.mxu0 0
    %125 = vmatpush1.bf16.msra.mxu0 0
    %126 = vmatprep.subr.bf16.mxu0 0
    %127 = vmatpush1.bf16.msra.mxu0 0
    %128 = vmatprep.subr.bf16.mxu0 0
    %129 = vmatpush1.bf16.msra.mxu0 0
    %130 = vmatprep.subr.bf16.mxu0 0
    %131 = vmatpush1.bf16.msra.mxu0 0
    %132 = vmatprep.subr.bf16.mxu0 0
    %133 = vmatpush1.bf16.msra.mxu0 0
    %134 = vmatprep.subr.bf16.mxu0 0
    %135 = vmatpush1.bf16.msra.mxu0 0
    %136 = vmatprep.subr.bf16.mxu0 0
    %137 = vmatpush1.bf16.msra.mxu0 0
    %138 = vmatprep.subr.bf16.mxu0 0
    %139 = vmatpush1.bf16.msra.mxu0 0
    %140 = vmatprep.subr.bf16.mxu0 0
    %141 = vmatpush1.bf16.msra.mxu0 0
    %142 = vmatprep.subr.bf16.mxu0 0
    %143 = vmatpush1.bf16.msra.mxu0 0
    %144 = vmatprep.subr.bf16.mxu0 0
    %145 = vmatpush1.bf16.msra.mxu0 0
    %146 = vmatprep.subr.bf16.mxu0 0
    %147 = vmatpush1.bf16.msra.mxu0 0
    %148 = vmatprep.subr.bf16.mxu0 0
    %149 = vmatpush1.bf16.msra.mxu0 0
    %150 = vmatprep.subr.bf16.mxu0 0
    %151 = vmatpush1.bf16.msra.mxu0 0
    %152 = vmatprep.mubr.bf16.mxu0 0
    %153 = vmatmul.mubr.bf16.gmra.mrb[0].mxu0 %v109
    %v154 = vpop.f32.mrb[0].mxu0
    %v155 = vadd.f32 %v59, %v154
    %v156 = vpop.f32.mrb[0].mxu0
    %v157 = vadd.f32 %v63, %v156
    %v158 = vpop.f32.mrb[0].mxu0
    %v159 = vadd.f32 %v59, %v158
    %v160 = vpop.f32.mrb[0].mxu0
    %v161 = vadd.f32 %v63, %v160
    %162 = vmatprep.mubr.bf16.mxu0 0
    %163 = vmatmul.mubr.bf16.gmra.mrb[0].mxu0 %v112
    %v164 = vpop.f32.mrb[0].mxu0
    %v165 = vadd.f32 %v59, %v164
    %v166 = vpop.f32.mrb[0].mxu0
    %v167 = vadd.f32 %v63, %v166
    %v168 = vpop.f32.mrb[0].mxu0
    %v169 = vadd.f32 %v59, %v168
    %v170 = vpop.f32.mrb[0].mxu0
    %v171 = vadd.f32 %v63, %v170
    %172 = vmatprep.mubr.bf16.mxu0 0
    %173 = vmatmul.mubr.bf16.gmra.mrb[0].mxu0 %v115
    %v174 = vpop.f32.mrb[0].mxu0
    %v175 = vadd.f32 %v59, %v174
    %v176 = vpop.f32.mrb[0].mxu0
    %v177 = vadd.f32 %v63, %v176
    %v178 = vpop.f32.mrb[0].mxu0
    %v179 = vadd.f32 %v59, %v178
    %v180 = vpop.f32.mrb[0].mxu0
    %v181 = vadd.f32 %v63, %v180
    %182 = vmatprep.mubr.bf16.mxu0 0
    %183 = vmatmul.mubr.bf16.gmra.mrb[0].mxu0 %v118
    %v184 = vpop.f32.mrb[0].mxu0
    %v185 = vadd.f32 %v59, %v184
    %v186 = vpop.f32.mrb[0].mxu0
    %v187 = vadd.f32 %v63, %v186
    %v188 = vpop.f32.mrb[0].mxu0
    %v189 = vadd.f32 %v59, %v188
    %v190 = vpop.f32.mrb[0].mxu0
    %v191 = vadd.f32 %v63, %v190
    %192 = vdwg.mxu0
    %193 = vmatprep.subr.bf16.mxu0 0
    %194 = vmatpush1.bf16.msra.mxu0 %v103
    %195 = vmatprep.subr.bf16.mxu0 0
    %196 = vmatpush1.bf16.msra.mxu0 0
    %197 = vmatprep.subr.bf16.mxu0 0
    %198 = vmatpush1.bf16.msra.mxu0 0
    %199 = vmatprep.subr.bf16.mxu0 0
    %200 = vmatpush1.bf16.msra.mxu0 0
    %201 = vmatprep.subr.bf16.mxu0 0
    %202 = vmatpush1.bf16.msra.mxu0 0
    %203 = vmatprep.subr.bf16.mxu0 0
    %204 = vmatpush1.bf16.msra.mxu0 0
    %205 = vmatprep.subr.bf16.mxu0 0
    %206 = vmatpush1.bf16.msra.mxu0 0
    %207 = vmatprep.subr.bf16.mxu0 0
    %208 = vmatpush1.bf16.msra.mxu0 0
    %209 = vmatprep.subr.bf16.mxu0 0
    %210 = vmatpush1.bf16.msra.mxu0 0
    %211 = vmatprep.subr.bf16.mxu0 0
    %212 = vmatpush1.bf16.msra.mxu0 0
    %213 = vmatprep.subr.bf16.mxu0 0
    %214 = vmatpush1.bf16.msra.mxu0 0
    %215 = vmatprep.subr.bf16.mxu0 0
    %216 = vmatpush1.bf16.msra.mxu0 0
    %217 = vmatprep.subr.bf16.mxu0 0
    %218 = vmatpush1.bf16.msra.mxu0 0
    %219 = vmatprep.subr.bf16.mxu0 0
    %220 = vmatpush1.bf16.msra.mxu0 0
    %221 = vmatprep.subr.bf16.mxu0 0
    %222 = vmatpush1.bf16.msra.mxu0 0
    %223 = vmatprep.subr.bf16.mxu0 0
    %224 = vmatpush1.bf16.msra.mxu0 0
    %225 = vmatprep.mubr.bf16.mxu0 0
    %226 = vmatmul.mubr.bf16.gmra.mrb[0].mxu0 %v109
    %v227 = vpop.f32.mrb[0].mxu0
    %v228 = vadd.f32 %v67, %v227
    %v229 = vpop.f32.mrb[0].mxu0
    %v230 = vpop.f32.mrb[0].mxu0
    %v231 = vadd.f32 %v67, %v230
    %v232 = vpop.f32.mrb[0].mxu0
    %233 = vmatprep.mubr.bf16.mxu0 0
    %234 = vmatmul.mubr.bf16.gmra.mrb[0].mxu0 %v112
    %v235 = vpop.f32.mrb[0].mxu0
    %v236 = vadd.f32 %v67, %v235
    %v237 = vpop.f32.mrb[0].mxu0
    %v238 = vpop.f32.mrb[0].mxu0
    %v239 = vadd.f32 %v67, %v238
    %v240 = vpop.f32.mrb[0].mxu0
    %241 = vmatprep.mubr.bf16.mxu0 0
    %242 = vmatmul.mubr.bf16.gmra.mrb[0].mxu0 %v115
    %v243 = vpop.f32.mrb[0].mxu0
    %v244 = vadd.f32 %v67, %v243
    %v245 = vpop.f32.mrb[0].mxu0
    %v246 = vpop.f32.mrb[0].mxu0
    %v247 = vadd.f32 %v67, %v246
    %v248 = vpop.f32.mrb[0].mxu0
    %249 = vmatprep.mubr.bf16.mxu0 0
    %250 = vmatmul.mubr.bf16.gmra.mrb[0].mxu0 %v118
    %v251 = vpop.f32.mrb[0].mxu0
    %v252 = vadd.f32 %v67, %v251
    %v253 = vpop.f32.mrb[0].mxu0
    %v254 = vpop.f32.mrb[0].mxu0
    %v255 = vadd.f32 %v67, %v254
    %v256 = vpop.f32.mrb[0].mxu0
    %257 = vdwg.mxu0
    %258 = vst [vmem:[#allocation2] sm:$0xff] %v155
    %259 = vst [vmem:[#allocation2 + $0x8] sm:$0xff] %v157
    %260 = vst [vmem:[#allocation2 + $0x10] sm:$0xff] %v228
    %261 = vst [vmem:[#allocation2 + $0x18] sm:$0xff] %v159
    %262 = vst [vmem:[#allocation2 + $0x20] sm:$0xff] %v161
    %263 = vst [vmem:[#allocation2 + $0x28] sm:$0xff] %v231
    %264 = vst [vmem:[#allocation2 + $0x30] sm:$0xff] %v165
    %265 = vst [vmem:[#allocation2 + $0x38] sm:$0xff] %v167
    %266 = vst [vmem:[#allocation2 + $0x40] sm:$0xff] %v236
    %267 = vst [vmem:[#allocation2 + $0x48] sm:$0xff] %v169
    %268 = vst [vmem:[#allocation2 + $0x50] sm:$0xff] %v171
    %269 = vst [vmem:[#allocation2 + $0x58] sm:$0xff] %v239
    %270 = vst [vmem:[#allocation2 + $0x60] sm:$0xff] %v175
    %271 = vst [vmem:[#allocation2 + $0x68] sm:$0xff] %v177
    %272 = vst [vmem:[#allocation2 + $0x70] sm:$0xff] %v244
    %273 = vst [vmem:[#allocation2 + $0x78] sm:$0xff] %v179
    %274 = vst [vmem:[#allocation2 + $0x80] sm:$0xff] %v181
    %275 = vst [vmem:[#allocation2 + $0x88] sm:$0xff] %v247
    %276 = vst [vmem:[#allocation2 + $0x90] sm:$0xff] %v185
    %277 = vst [vmem:[#allocation2 + $0x98] sm:$0xff] %v187
    %278 = vst [vmem:[#allocation2 + $0xa0] sm:$0xff] %v252
    %279 = vst [vmem:[#allocation2 + $0xa8] sm:$0xff] %v189
    %280 = vst [vmem:[#allocation2 + $0xb0] sm:$0xff] %v191
    %281 = vst [vmem:[#allocation2 + $0xb8] sm:$0xff] %v255
    %v282 = vld [vmem:[%s1] sm:$0xff]
    %v283 = vld [vmem:[%s5] sm:$0x1]
    %v285 = vlaneseq
    %v286 = vshrl.u32 %v285, 7
    %v287 = vsub.s32 0, %v286
    %v288 = vrot.slane %v283, %v287
    %s290 = smul.u32 0, 3
    %s291 = smul.addr %s290, 8
    %s292 = scalar_lea.vmem [#allocation2], %s291
    %v293 = vld [vmem:[%s292] sm:$0xff]
    %v294 = vld [vmem:[%s292 + $0x8] sm:$0xff]
    %v295 = vld [vmem:[%s292 + $0x10] sm:$0xff]
    %v296 = vld [vmem:[#allocation3] sm:$0xff]
    %v297 = vld [vmem:[#allocation3 + $0x8] sm:$0xf]
    %v298 = vld [vmem:[#allocation3 + $0xc] sm:$0xff]
    %v299 = vld [vmem:[#allocation3 + $0x14] sm:$0xf]
    %v300 = vld [vmem:[#allocation3 + $0x18] sm:$0xff]
    %v301 = vld [vmem:[#allocation3 + $0x20] sm:$0xf]
    %v302 = vld [vmem:[#allocation3 + $0x24] sm:$0xff]
    %v303 = vld [vmem:[#allocation3 + $0x2c] sm:$0xf]
    %v304 = vld [vmem:[#allocation3 + $0x30] sm:$0xff]
    %v305 = vld [vmem:[#allocation3 + $0x38] sm:$0xf]
    %v306 = vld [vmem:[#allocation3 + $0x3c] sm:$0xff]
    %v307 = vld [vmem:[#allocation3 + $0x44] sm:$0xf]
    %v308 = vld [vmem:[#allocation3 + $0x48] sm:$0xff]
    %v309 = vld [vmem:[#allocation3 + $0x50] sm:$0xf]
    %v310 = vld [vmem:[#allocation3 + $0x54] sm:$0xff]
    %v311 = vld [vmem:[#allocation3 + $0x5c] sm:$0xf]
    %v312 = vld [vmem:[#allocation3 + $0x60] sm:$0xff]
    %v313 = vld [vmem:[#allocation3 + $0x68] sm:$0xf]
    %v314 = vld [vmem:[#allocation3 + $0x6c] sm:$0xff]
    %v315 = vld [vmem:[#allocation3 + $0x74] sm:$0xf]
    %v316 = vld [vmem:[#allocation3 + $0x78] sm:$0xff]
    %v317 = vld [vmem:[#allocation3 + $0x80] sm:$0xf]
    %v318 = vld [vmem:[#allocation3 + $0x84] sm:$0xff]
    %v319 = vld [vmem:[#allocation3 + $0x8c] sm:$0xf]
    %v320 = vld [vmem:[#allocation3 + $0x90] sm:$0xff]
    %v321 = vld [vmem:[#allocation3 + $0x98] sm:$0xf]
    %v322 = vld [vmem:[#allocation3 + $0x9c] sm:$0xff]
    %v323 = vld [vmem:[#allocation3 + $0xa4] sm:$0xf]
    %v324 = vld [vmem:[#allocation3 + $0xa8] sm:$0xff]
    %v325 = vld [vmem:[#allocation3 + $0xb0] sm:$0xf]
    %v326 = vld [vmem:[#allocation3 + $0xb4] sm:$0xff]
    %v327 = vld [vmem:[#allocation3 + $0xbc] sm:$0xf]
    %v360 = vunpack.c.l.b16 %v296
    %v361 = vunpack.c.h.b16 %v296
    %v362 = vunpack.c.l.b16 %v297
    %v363 = vunpack.c.l.b16 %v298
    %v364 = vunpack.c.h.b16 %v298
    %v365 = vunpack.c.l.b16 %v299
    %v366 = vunpack.c.l.b16 %v300
    %v367 = vunpack.c.h.b16 %v300
    %v368 = vunpack.c.l.b16 %v301
    %v369 = vunpack.c.l.b16 %v302
    %v370 = vunpack.c.h.b16 %v302
    %v371 = vunpack.c.l.b16 %v303
    %v372 = vunpack.c.l.b16 %v304
    %v373 = vunpack.c.h.b16 %v304
    %v374 = vunpack.c.l.b16 %v305
    %v375 = vunpack.c.l.b16 %v306
    %v376 = vunpack.c.h.b16 %v306
    %v377 = vunpack.c.l.b16 %v307
    %v378 = vunpack.c.l.b16 %v308
    %v379 = vunpack.c.h.b16 %v308
    %v380 = vunpack.c.l.b16 %v309
    %v381 = vunpack.c.l.b16 %v310
    %v382 = vunpack.c.h.b16 %v310
    %v383 = vunpack.c.l.b16 %v311
    %v384 = vunpack.c.l.b16 %v312
    %v385 = vunpack.c.h.b16 %v312
    %v386 = vunpack.c.l.b16 %v313
    %v387 = vunpack.c.l.b16 %v314
    %v388 = vunpack.c.h.b16 %v314
    %v389 = vunpack.c.l.b16 %v315
    %v390 = vunpack.c.l.b16 %v316
    %v391 = vunpack.c.h.b16 %v316
    %v392 = vunpack.c.l.b16 %v317
    %v393 = vunpack.c.l.b16 %v318
    %v394 = vunpack.c.h.b16 %v318
    %v395 = vunpack.c.l.b16 %v319
    %v396 = vunpack.c.l.b16 %v320
    %v397 = vunpack.c.h.b16 %v320
    %v398 = vunpack.c.l.b16 %v321
    %v399 = vunpack.c.l.b16 %v322
    %v400 = vunpack.c.h.b16 %v322
    %v401 = vunpack.c.l.b16 %v323
    %v402 = vunpack.c.l.b16 %v324
    %v403 = vunpack.c.h.b16 %v324
    %v404 = vunpack.c.l.b16 %v325
    %v405 = vunpack.c.l.b16 %v326
    %v406 = vunpack.c.h.b16 %v326
    %v407 = vunpack.c.l.b16 %v327
    %v408 = vpack.c.b16 %v363, %v360
    %v409 = vpack.c.b16 %v364, %v361
    %v410 = vpack.c.b16 %v365, %v362
    %v411 = vpack.c.b16 %v369, %v366
    %v412 = vpack.c.b16 %v370, %v367
    %v413 = vpack.c.b16 %v371, %v368
    %v414 = vpack.c.b16 %v375, %v372
    %v415 = vpack.c.b16 %v376, %v373
    %v416 = vpack.c.b16 %v377, %v374
    %v417 = vpack.c.b16 %v381, %v378
    %v418 = vpack.c.b16 %v382, %v379
    %v419 = vpack.c.b16 %v383, %v380
    %v420 = vpack.c.b16 %v387, %v384
    %v421 = vpack.c.b16 %v388, %v385
    %v422 = vpack.c.b16 %v389, %v386
    %v423 = vpack.c.b16 %v393, %v390
    %v424 = vpack.c.b16 %v394, %v391
    %v425 = vpack.c.b16 %v395, %v392
    %v426 = vpack.c.b16 %v399, %v396
    %v427 = vpack.c.b16 %v400, %v397
    %v428 = vpack.c.b16 %v401, %v398
    %v429 = vpack.c.b16 %v405, %v402
    %v430 = vpack.c.b16 %v406, %v403
    %v431 = vpack.c.b16 %v407, %v404
    %456 = vmatprep.subr.bf16.mxu0 %v409
    %457 = vmatpush1.bf16.msra.mxu0 %v408
    %458 = vmatprep.subr.bf16.mxu0 %v412
    %459 = vmatpush1.bf16.msra.mxu0 %v411
    %460 = vmatprep.subr.bf16.mxu0 %v415
    %461 = vmatpush1.bf16.msra.mxu0 %v414
    %462 = vmatprep.subr.bf16.mxu0 %v418
    %463 = vmatpush1.bf16.msra.mxu0 %v417
    %464 = vmatprep.subr.bf16.mxu0 %v421
    %465 = vmatpush1.bf16.msra.mxu0 %v420
    %466 = vmatprep.subr.bf16.mxu0 %v424
    %467 = vmatpush1.bf16.msra.mxu0 %v423
    %468 = vmatprep.subr.bf16.mxu0 %v427
    %469 = vmatpush1.bf16.msra.mxu0 %v426
    %470 = vmatprep.subr.bf16.mxu0 %v430
    %471 = vmatpush1.bf16.msra.mxu0 %v429
    %472 = vmatprep.subr.bf16.mxu0 0
    %473 = vmatpush1.bf16.msra.mxu0 0
    %474 = vmatprep.subr.bf16.mxu0 0
    %475 = vmatpush1.bf16.msra.mxu0 0
    %476 = vmatprep.subr.bf16.mxu0 0
    %477 = vmatpush1.bf16.msra.mxu0 0
    %478 = vmatprep.subr.bf16.mxu0 0
    %479 = vmatpush1.bf16.msra.mxu0 0
    %480 = vmatprep.subr.bf16.mxu0 0
    %481 = vmatpush1.bf16.msra.mxu0 0
    %482 = vmatprep.subr.bf16.mxu0 0
    %483 = vmatpush1.bf16.msra.mxu0 0
    %484 = vmatprep.subr.bf16.mxu0 0
    %485 = vmatpush1.bf16.msra.mxu0 0
    %486 = vmatprep.subr.bf16.mxu0 0
    %487 = vmatpush1.bf16.msra.mxu0 0
    %488 = vmatprep.mubr.bf16.mxu0 0
    %489 = vmatmul.mubr.bf16.gmra.mrb[0].mxu0 0
    %v490 = vpop.f32.mrb[0].mxu0
    %v491 = vadd.f32 0.0, %v490
    %v492 = vpop.f32.mrb[0].mxu0
    %v493 = vadd.f32 0.0, %v492
    %v494 = vpop.f32.mrb[0].mxu0
    %v495 = vpop.f32.mrb[0].mxu0
    %496 = vdwg.mxu0
    %497 = vmatprep.subr.bf16.mxu0 0
    %498 = vmatpush1.bf16.msra.mxu0 %v410
    %499 = vmatprep.subr.bf16.mxu0 0
    %500 = vmatpush1.bf16.msra.mxu0 %v413
    %501 = vmatprep.subr.bf16.mxu0 0
    %502 = vmatpush1.bf16.msra.mxu0 %v416
    %503 = vmatprep.subr.bf16.mxu0 0
    %504 = vmatpush1.bf16.msra.mxu0 %v419
    %505 = vmatprep.subr.bf16.mxu0 0
    %506 = vmatpush1.bf16.msra.mxu0 %v422
    %507 = vmatprep.subr.bf16.mxu0 0
    %508 = vmatpush1.bf16.msra.mxu0 %v425
    %509 = vmatprep.subr.bf16.mxu0 0
    %510 = vmatpush1.bf16.msra.mxu0 %v428
    %511 = vmatprep.subr.bf16.mxu0 0
    %512 = vmatpush1.bf16.msra.mxu0 %v431
    %513 = vmatprep.subr.bf16.mxu0 0
    %514 = vmatpush1.bf16.msra.mxu0 0
    %515 = vmatprep.subr.bf16.mxu0 0
    %516 = vmatpush1.bf16.msra.mxu0 0
    %517 = vmatprep.subr.bf16.mxu0 0
    %518 = vmatpush1.bf16.msra.mxu0 0
    %519 = vmatprep.subr.bf16.mxu0 0
    %520 = vmatpush1.bf16.msra.mxu0 0
    %521 = vmatprep.subr.bf16.mxu0 0
    %522 = vmatpush1.bf16.msra.mxu0 0
    %523 = vmatprep.subr.bf16.mxu0 0
    %524 = vmatpush1.bf16.msra.mxu0 0
    %525 = vmatprep.subr.bf16.mxu0 0
    %526 = vmatpush1.bf16.msra.mxu0 0
    %527 = vmatprep.subr.bf16.mxu0 0
    %528 = vmatpush1.bf16.msra.mxu0 0
    %529 = vmatprep.mubr.bf16.mxu0 0
    %530 = vmatmul.mubr.bf16.gmra.mrb[0].mxu0 0
    %v531 = vpop.f32.mrb[0].mxu0
    %v532 = vadd.f32 0.0, %v531
    %v533 = vpop.f32.mrb[0].mxu0
    %v534 = vpop.f32.mrb[0].mxu0
    %v535 = vpop.f32.mrb[0].mxu0
    %536 = vdwg.mxu0
    %v537 = vadd.f32 %v293, %v491
    %v538 = vxor.u32 %v537, 2147483648
    %v539 = vmul.f32 %v538, 1.442695
    %v540 = vpow.pop %v539
    %v541 = vadd.f32 %v540, 1.0
    %v542 = vrcp.pop %v541
    %v543 = vmul.f32 1.0, %v542
    %v544 = vadd.f32 %v294, %v493
    %v545 = vxor.u32 %v544, 2147483648
    %v546 = vmul.f32 %v545, 1.442695
    %v547 = vpow.pop %v546
    %v548 = vadd.f32 %v547, 1.0
    %v549 = vrcp.pop %v548
    %v550 = vmul.f32 1.0, %v549
    %v551 = vadd.f32 %v532, %v288
    %v552 = vmul.f32 %v543, %v551
    %v553 = vadd.f32 %v295, %v552
    %v554 = vtanh.pop %v553
    %v555 = vsub.f32 0.0, %v554
    %v556 = vmul.f32 %v550, %v555
    %v557 = vadd.f32 %v554, %v556
    %vm558 = vcmp.gt.s32.totalorder %v282, 0
    %v559 = vsel %vm558, 1, 0
    %560 = vset.pattern.permute.xlu0 0
    %561 = vperm.xlu0 %560, %v559
    %v562 = vpop.permute.xlu0 %561
    %vm563 = vcmp.eq.s32.totalorder %v562, 1
    %v564 = vsel %vm563, %v557, 0.0
    %565 = vst [vmem:[#allocation6] sm:$0xff] %v564
    %s566 = smul.u32 1, 3
    %s567 = smul.addr %s566, 8
    %s568 = scalar_lea.vmem [#allocation2], %s567
    %v569 = vld [vmem:[%s568] sm:$0xff]
    %v570 = vld [vmem:[%s568 + $0x8] sm:$0xff]
    %v571 = vld [vmem:[%s568 + $0x10] sm:$0xff]
    %v572 = vpack.c.bf16 %v564, %v564
    %v573 = vld [vmem:[#allocation3] sm:$0xff]
    %v574 = vld [vmem:[#allocation3 + $0x8] sm:$0xf]
    %v575 = vld [vmem:[#allocation3 + $0xc] sm:$0xff]
    %v576 = vld [vmem:[#allocation3 + $0x14] sm:$0xf]
    %v577 = vld [vmem:[#allocation3 + $0x18] sm:$0xff]
    %v578 = vld [vmem:[#allocation3 + $0x20] sm:$0xf]
    %v579 = vld [vmem:[#allocation3 + $0x24] sm:$0xff]
    %v580 = vld [vmem:[#allocation3 + $0x2c] sm:$0xf]
    %v581 = vld [vmem:[#allocation3 + $0x30] sm:$0xff]
    %v582 = vld [vmem:[#allocation3 + $0x38] sm:$0xf]
    %v583 = vld [vmem:[#allocation3 + $0x3c] sm:$0xff]
    %v584 = vld [vmem:[#allocation3 + $0x44] sm:$0xf]
    %v585 = vld [vmem:[#allocation3 + $0x48] sm:$0xff]
    %v586 = vld [vmem:[#allocation3 + $0x50] sm:$0xf]
    %v587 = vld [vmem:[#allocation3 + $0x54] sm:$0xff]
    %v588 = vld [vmem:[#allocation3 + $0x5c] sm:$0xf]
    %v589 = vld [vmem:[#allocation3 + $0x60] sm:$0xff]
    %v590 = vld [vmem:[#allocation3 + $0x68] sm:$0xf]
    %v591 = vld [vmem:[#allocation3 + $0x6c] sm:$0xff]
    %v592 = vld [vmem:[#allocation3 + $0x74] sm:$0xf]
    %v593 = vld [vmem:[#allocation3 + $0x78] sm:$0xff]
    %v594 = vld [vmem:[#allocation3 + $0x80] sm:$0xf]
    %v595 = vld [vmem:[#allocation3 + $0x84] sm:$0xff]
    %v596 = vld [vmem:[#allocation3 + $0x8c] sm:$0xf]
    %v597 = vld [vmem:[#allocation3 + $0x90] sm:$0xff]
    %v598 = vld [vmem:[#allocation3 + $0x98] sm:$0xf]
    %v599 = vld [vmem:[#allocation3 + $0x9c] sm:$0xff]
    %v600 = vld [vmem:[#allocation3 + $0xa4] sm:$0xf]
    %v601 = vld [vmem:[#allocation3 + $0xa8] sm:$0xff]
    %v602 = vld [vmem:[#allocation3 + $0xb0] sm:$0xf]
    %v603 = vld [vmem:[#allocation3 + $0xb4] sm:$0xff]
    %v604 = vld [vmem:[#allocation3 + $0xbc] sm:$0xf]
    %v637 = vunpack.c.l.b16 %v573
    %v638 = vunpack.c.h.b16 %v573
    %v639 = vunpack.c.l.b16 %v574
    %v640 = vunpack.c.l.b16 %v575
    %v641 = vunpack.c.h.b16 %v575
    %v642 = vunpack.c.l.b16 %v576
    %v643 = vunpack.c.l.b16 %v577
    %v644 = vunpack.c.h.b16 %v577
    %v645 = vunpack.c.l.b16 %v578
    %v646 = vunpack.c.l.b16 %v579
    %v647 = vunpack.c.h.b16 %v579
    %v648 = vunpack.c.l.b16 %v580
    %v649 = vunpack.c.l.b16 %v581
    %v650 = vunpack.c.h.b16 %v581
    %v651 = vunpack.c.l.b16 %v582
    %v652 = vunpack.c.l.b16 %v583
    %v653 = vunpack.c.h.b16 %v583
    %v654 = vunpack.c.l.b16 %v584
    %v655 = vunpack.c.l.b16 %v585
    %v656 = vunpack.c.h.b16 %v585
    %v657 = vunpack.c.l.b16 %v586
    %v658 = vunpack.c.l.b16 %v587
    %v659 = vunpack.c.h.b16 %v587
    %v660 = vunpack.c.l.b16 %v588
    %v661 = vunpack.c.l.b16 %v589
    %v662 = vunpack.c.h.b16 %v589
    %v663 = vunpack.c.l.b16 %v590
    %v664 = vunpack.c.l.b16 %v591
    %v665 = vunpack.c.h.b16 %v591
    %v666 = vunpack.c.l.b16 %v592
    %v667 = vunpack.c.l.b16 %v593
    %v668 = vunpack.c.h.b16 %v593
    %v669 = vunpack.c.l.b16 %v594
    %v670 = vunpack.c.l.b16 %v595
    %v671 = vunpack.c.h.b16 %v595
    %v672 = vunpack.c.l.b16 %v596
    %v673 = vunpack.c.l.b16 %v597
    %v674 = vunpack.c.h.b16 %v597
    %v675 = vunpack.c.l.b16 %v598
    %v676 = vunpack.c.l.b16 %v599
    %v677 = vunpack.c.h.b16 %v599
    %v678 = vunpack.c.l.b16 %v600
    %v679 = vunpack.c.l.b16 %v601
    %v680 = vunpack.c.h.b16 %v601
    %v681 = vunpack.c.l.b16 %v602
    %v682 = vunpack.c.l.b16 %v603
    %v683 = vunpack.c.h.b16 %v603
    %v684 = vunpack.c.l.b16 %v604
    %v685 = vpack.c.b16 %v640, %v637
    %v686 = vpack.c.b16 %v641, %v638
    %v687 = vpack.c.b16 %v642, %v639
    %v688 = vpack.c.b16 %v646, %v643
    %v689 = vpack.c.b16 %v647, %v644
    %v690 = vpack.c.b16 %v648, %v645
    %v691 = vpack.c.b16 %v652, %v649
    %v692 = vpack.c.b16 %v653, %v650
    %v693 = vpack.c.b16 %v654, %v651
    %v694 = vpack.c.b16 %v658, %v655
    %v695 = vpack.c.b16 %v659, %v656
    %v696 = vpack.c.b16 %v660, %v657
    %v697 = vpack.c.b16 %v664, %v661
    %v698 = vpack.c.b16 %v665, %v662
    %v699 = vpack.c.b16 %v666, %v663
    %v700 = vpack.c.b16 %v670, %v667
    %v701 = vpack.c.b16 %v671, %v668
    %v702 = vpack.c.b16 %v672, %v669
    %v703 = vpack.c.b16 %v676, %v673
    %v704 = vpack.c.b16 %v677, %v674
    %v705 = vpack.c.b16 %v678, %v675
    %v706 = vpack.c.b16 %v682, %v679
    %v707 = vpack.c.b16 %v683, %v680
    %v708 = vpack.c.b16 %v684, %v681
    %733 = vmatprep.subr.bf16.mxu0 %v686
    %734 = vmatpush1.bf16.msra.mxu0 %v685
    %735 = vmatprep.subr.bf16.mxu0 %v689
    %736 = vmatpush1.bf16.msra.mxu0 %v688
    %737 = vmatprep.subr.bf16.mxu0 %v692
    %738 = vmatpush1.bf16.msra.mxu0 %v691
    %739 = vmatprep.subr.bf16.mxu0 %v695
    %740 = vmatpush1.bf16.msra.mxu0 %v694
    %741 = vmatprep.subr.bf16.mxu0 %v698
    %742 = vmatpush1.bf16.msra.mxu0 %v697
    %743 = vmatprep.subr.bf16.mxu0 %v701
    %744 = vmatpush1.bf16.msra.mxu0 %v700
    %745 = vmatprep.subr.bf16.mxu0 %v704
    %746 = vmatpush1.bf16.msra.mxu0 %v703
    %747 = vmatprep.subr.bf16.mxu0 %v707
    %748 = vmatpush1.bf16.msra.mxu0 %v706
    %749 = vmatprep.subr.bf16.mxu0 0
    %750 = vmatpush1.bf16.msra.mxu0 0
    %751 = vmatprep.subr.bf16.mxu0 0
    %752 = vmatpush1.bf16.msra.mxu0 0
    %753 = vmatprep.subr.bf16.mxu0 0
    %754 = vmatpush1.bf16.msra.mxu0 0
    %755 = vmatprep.subr.bf16.mxu0 0
    %756 = vmatpush1.bf16.msra.mxu0 0
    %757 = vmatprep.subr.bf16.mxu0 0
    %758 = vmatpush1.bf16.msra.mxu0 0
    %759 = vmatprep.subr.bf16.mxu0 0
    %760 = vmatpush1.bf16.msra.mxu0 0
    %761 = vmatprep.subr.bf16.mxu0 0
    %762 = vmatpush1.bf16.msra.mxu0 0
    %763 = vmatprep.subr.bf16.mxu0 0
    %764 = vmatpush1.bf16.msra.mxu0 0
    %765 = vmatprep.mubr.bf16.mxu0 0
    %766 = vmatmul.mubr.bf16.gmra.mrb[0].mxu0 %v572
    %v767 = vpop.f32.mrb[0].mxu0
    %v768 = vadd.f32 0.0, %v767
    %v769 = vpop.f32.mrb[0].mxu0
    %v770 = vadd.f32 0.0, %v769
    %v771 = vpop.f32.mrb[0].mxu0
    %v772 = vpop.f32.mrb[0].mxu0
    %773 = vdwg.mxu0
    %774 = vmatprep.subr.bf16.mxu0 0
    %775 = vmatpush1.bf16.msra.mxu0 %v687
    %776 = vmatprep.subr.bf16.mxu0 0
    %777 = vmatpush1.bf16.msra.mxu0 %v690
    %778 = vmatprep.subr.bf16.mxu0 0
    %779 = vmatpush1.bf16.msra.mxu0 %v693
    %780 = vmatprep.subr.bf16.mxu0 0
    %781 = vmatpush1.bf16.msra.mxu0 %v696
    %782 = vmatprep.subr.bf16.mxu0 0
    %783 = vmatpush1.bf16.msra.mxu0 %v699
    %784 = vmatprep.subr.bf16.mxu0 0
    %785 = vmatpush1.bf16.msra.mxu0 %v702
    %786 = vmatprep.subr.bf16.mxu0 0
    %787 = vmatpush1.bf16.msra.mxu0 %v705
    %788 = vmatprep.subr.bf16.mxu0 0
    %789 = vmatpush1.bf16.msra.mxu0 %v708
    %790 = vmatprep.subr.bf16.mxu0 0
    %791 = vmatpush1.bf16.msra.mxu0 0
    %792 = vmatprep.subr.bf16.mxu0 0
    %793 = vmatpush1.bf16.msra.mxu0 0
    %794 = vmatprep.subr.bf16.mxu0 0
    %795 = vmatpush1.bf16.msra.mxu0 0
    %796 = vmatprep.subr.bf16.mxu0 0
    %797 = vmatpush1.bf16.msra.mxu0 0
    %798 = vmatprep.subr.bf16.mxu0 0
    %799 = vmatpush1.bf16.msra.mxu0 0
    %800 = vmatprep.subr.bf16.mxu0 0
    %801 = vmatpush1.bf16.msra.mxu0 0
    %802 = vmatprep.subr.bf16.mxu0 0
    %803 = vmatpush1.bf16.msra.mxu0 0
    %804 = vmatprep.subr.bf16.mxu0 0
    %805 = vmatpush1.bf16.msra.mxu0 0
    %806 = vmatprep.mubr.bf16.mxu0 0
    %807 = vmatmul.mubr.bf16.gmra.mrb[0].mxu0 %v572
    %v808 = vpop.f32.mrb[0].mxu0
    %v809 = vadd.f32 0.0, %v808
    %v810 = vpop.f32.mrb[0].mxu0
    %v811 = vpop.f32.mrb[0].mxu0
    %v812 = vpop.f32.mrb[0].mxu0
    %813 = vdwg.mxu0
    %v814 = vadd.f32 %v569, %v768
    %v815 = vxor.u32 %v814, 2147483648
    %v816 = vmul.f32 %v815, 1.442695
    %v817 = vpow.pop %v816
    %v818 = vadd.f32 %v817, 1.0
    %v819 = vrcp.pop %v818
    %v820 = vmul.f32 1.0, %v819
    %v821 = vadd.f32 %v570, %v770
    %v822 = vxor.u32 %v821, 2147483648
    %v823 = vmul.f32 %v822, 1.442695
    %v824 = vpow.pop %v823
    %v825 = vadd.f32 %v824, 1.0
    %v826 = vrcp.pop %v825
    %v827 = vmul.f32 1.0, %v826
    %v828 = vadd.f32 %v809, %v288
    %v829 = vmul.f32 %v820, %v828
    %v830 = vadd.f32 %v571, %v829
    %v831 = vtanh.pop %v830
    %v832 = vsub.f32 %v564, %v831
    %v833 = vmul.f32 %v827, %v832
    %v834 = vadd.f32 %v831, %v833
    %vm835 = vcmp.gt.s32.totalorder %v282, 1
    %v836 = vsel %vm835, 1, 0
    %837 = vset.pattern.permute.xlu0 0
    %838 = vperm.xlu0 %837, %v836
    %v839 = vpop.permute.xlu0 %838
    %vm840 = vcmp.eq.s32.totalorder %v839, 1
    %v841 = vsel %vm840, %v834, 0.0
    %s842 = scalar_lea.vmem [#allocation6], 8
    %843 = vst [vmem:[%s842] sm:$0xff] %v841
    %v844 = vsel %vm840, %v834, %v564
    %s845 = smul.u32 2, 3
    %s846 = smul.addr %s845, 8
    %s847 = scalar_lea.vmem [#allocation2], %s846
    %v848 = vld [vmem:[%s847] sm:$0xff]
    %v849 = vld [vmem:[%s847 + $0x8] sm:$0xff]
    %v850 = vld [vmem:[%s847 + $0x10] sm:$0xff]
    %v851 = vpack.c.bf16 %v844, %v844
    %v852 = vld [vmem:[#allocation3] sm:$0xff]
    %v853 = vld [vmem:[#allocation3 + $0x8] sm:$0xf]
    %v854 = vld [vmem:[#allocation3 + $0xc] sm:$0xff]
    %v855 = vld [vmem:[#allocation3 + $0x14] sm:$0xf]
    %v856 = vld [vmem:[#allocation3 + $0x18] sm:$0xff]
    %v857 = vld [vmem:[#allocation3 + $0x20] sm:$0xf]
    %v858 = vld [vmem:[#allocation3 + $0x24] sm:$0xff]
    %v859 = vld [vmem:[#allocation3 + $0x2c] sm:$0xf]
    %v860 = vld [vmem:[#allocation3 + $0x30] sm:$0xff]
    %v861 = vld [vmem:[#allocation3 + $0x38] sm:$0xf]
    %v862 = vld [vmem:[#allocation3 + $0x3c] sm:$0xff]
    %v863 = vld [vmem:[#allocation3 + $0x44] sm:$0xf]
    %v864 = vld [vmem:[#allocation3 + $0x48] sm:$0xff]
    %v865 = vld [vmem:[#allocation3 + $0x50] sm:$0xf]
    %v866 = vld [vmem:[#allocation3 + $0x54] sm:$0xff]
    %v867 = vld [vmem:[#allocation3 + $0x5c] sm:$0xf]
    %v868 = vld [vmem:[#allocation3 + $0x60] sm:$0xff]
    %v869 = vld [vmem:[#allocation3 + $0x68] sm:$0xf]
    %v870 = vld [vmem:[#allocation3 + $0x6c] sm:$0xff]
    %v871 = vld [vmem:[#allocation3 + $0x74] sm:$0xf]
    %v872 = vld [vmem:[#allocation3 + $0x78] sm:$0xff]
    %v873 = vld [vmem:[#allocation3 + $0x80] sm:$0xf]
    %v874 = vld [vmem:[#allocation3 + $0x84] sm:$0xff]
    %v875 = vld [vmem:[#allocation3 + $0x8c] sm:$0xf]
    %v876 = vld [vmem:[#allocation3 + $0x90] sm:$0xff]
    %v877 = vld [vmem:[#allocation3 + $0x98] sm:$0xf]
    %v878 = vld [vmem:[#allocation3 + $0x9c] sm:$0xff]
    %v879 = vld [vmem:[#allocation3 + $0xa4] sm:$0xf]
    %v880 = vld [vmem:[#allocation3 + $0xa8] sm:$0xff]
    %v881 = vld [vmem:[#allocation3 + $0xb0] sm:$0xf]
    %v882 = vld [vmem:[#allocation3 + $0xb4] sm:$0xff]
    %v883 = vld [vmem:[#allocation3 + $0xbc] sm:$0xf]
    %v916 = vunpack.c.l.b16 %v852
    %v917 = vunpack.c.h.b16 %v852
    %v918 = vunpack.c.l.b16 %v853
    %v919 = vunpack.c.l.b16 %v854
    %v920 = vunpack.c.h.b16 %v854
    %v921 = vunpack.c.l.b16 %v855
    %v922 = vunpack.c.l.b16 %v856
    %v923 = vunpack.c.h.b16 %v856
    %v924 = vunpack.c.l.b16 %v857
    %v925 = vunpack.c.l.b16 %v858
    %v926 = vunpack.c.h.b16 %v858
    %v927 = vunpack.c.l.b16 %v859
    %v928 = vunpack.c.l.b16 %v860
    %v929 = vunpack.c.h.b16 %v860
    %v930 = vunpack.c.l.b16 %v861
    %v931 = vunpack.c.l.b16 %v862
    %v932 = vunpack.c.h.b16 %v862
    %v933 = vunpack.c.l.b16 %v863
    %v934 = vunpack.c.l.b16 %v864
    %v935 = vunpack.c.h.b16 %v864
    %v936 = vunpack.c.l.b16 %v865
    %v937 = vunpack.c.l.b16 %v866
    %v938 = vunpack.c.h.b16 %v866
    %v939 = vunpack.c.l.b16 %v867
    %v940 = vunpack.c.l.b16 %v868
    %v941 = vunpack.c.h.b16 %v868
    %v942 = vunpack.c.l.b16 %v869
    %v943 = vunpack.c.l.b16 %v870
    %v944 = vunpack.c.h.b16 %v870
    %v945 = vunpack.c.l.b16 %v871
    %v946 = vunpack.c.l.b16 %v872
    %v947 = vunpack.c.h.b16 %v872
    %v948 = vunpack.c.l.b16 %v873
    %v949 = vunpack.c.l.b16 %v874
    %v950 = vunpack.c.h.b16 %v874
    %v951 = vunpack.c.l.b16 %v875
    %v952 = vunpack.c.l.b16 %v876
    %v953 = vunpack.c.h.b16 %v876
    %v954 = vunpack.c.l.b16 %v877
    %v955 = vunpack.c.l.b16 %v878
    %v956 = vunpack.c.h.b16 %v878
    %v957 = vunpack.c.l.b16 %v879
    %v958 = vunpack.c.l.b16 %v880
    %v959 = vunpack.c.h.b16 %v880
    %v960 = vunpack.c.l.b16 %v881
    %v961 = vunpack.c.l.b16 %v882
    %v962 = vunpack.c.h.b16 %v882
    %v963 = vunpack.c.l.b16 %v883
    %v964 = vpack.c.b16 %v919, %v916
    %v965 = vpack.c.b16 %v920, %v917
    %v966 = vpack.c.b16 %v921, %v918
    %v967 = vpack.c.b16 %v925, %v922
    %v968 = vpack.c.b16 %v926, %v923
    %v969 = vpack.c.b16 %v927, %v924
    %v970 = vpack.c.b16 %v931, %v928
    %v971 = vpack.c.b16 %v932, %v929
    %v972 = vpack.c.b16 %v933, %v930
    %v973 = vpack.c.b16 %v937, %v934
    %v974 = vpack.c.b16 %v938, %v935
    %v975 = vpack.c.b16 %v939, %v936
    %v976 = vpack.c.b16 %v943, %v940
    %v977 = vpack.c.b16 %v944, %v941
    %v978 = vpack.c.b16 %v945, %v942
    %v979 = vpack.c.b16 %v949, %v946
    %v980 = vpack.c.b16 %v950, %v947
    %v981 = vpack.c.b16 %v951, %v948
    %v982 = vpack.c.b16 %v955, %v952
    %v983 = vpack.c.b16 %v956, %v953
    %v984 = vpack.c.b16 %v957, %v954
    %v985 = vpack.c.b16 %v961, %v958
    %v986 = vpack.c.b16 %v962, %v959
    %v987 = vpack.c.b16 %v963, %v960
    %1012 = vmatprep.subr.bf16.mxu0 %v965
    %1013 = vmatpush1.bf16.msra.mxu0 %v964
    %1014 = vmatprep.subr.bf16.mxu0 %v968
    %1015 = vmatpush1.bf16.msra.mxu0 %v967
    %1016 = vmatprep.subr.bf16.mxu0 %v971
    %1017 = vmatpush1.bf16.msra.mxu0 %v970
    %1018 = vmatprep.subr.bf16.mxu0 %v974
    %1019 = vmatpush1.bf16.msra.mxu0 %v973
    %1020 = vmatprep.subr.bf16.mxu0 %v977
    %1021 = vmatpush1.bf16.msra.mxu0 %v976
    %1022 = vmatprep.subr.bf16.mxu0 %v980
    %1023 = vmatpush1.bf16.msra.mxu0 %v979
    %1024 = vmatprep.subr.bf16.mxu0 %v983
    %1025 = vmatpush1.bf16.msra.mxu0 %v982
    %1026 = vmatprep.subr.bf16.mxu0 %v986
    %1027 = vmatpush1.bf16.msra.mxu0 %v985
    %1028 = vmatprep.subr.bf16.mxu0 0
    %1029 = vmatpush1.bf16.msra.mxu0 0
    %1030 = vmatprep.subr.bf16.mxu0 0
    %1031 = vmatpush1.bf16.msra.mxu0 0
    %1032 = vmatprep.subr.bf16.mxu0 0
    %1033 = vmatpush1.bf16.msra.mxu0 0
    %1034 = vmatprep.subr.bf16.mxu0 0
    %1035 = vmatpush1.bf16.msra.mxu0 0
    %1036 = vmatprep.subr.bf16.mxu0 0
    %1037 = vmatpush1.bf16.msra.mxu0 0
    %1038 = vmatprep.subr.bf16.mxu0 0
    %1039 = vmatpush1.bf16.msra.mxu0 0
    %1040 = vmatprep.subr.bf16.mxu0 0
    %1041 = vmatpush1.bf16.msra.mxu0 0
    %1042 = vmatprep.subr.bf16.mxu0 0
    %1043 = vmatpush1.bf16.msra.mxu0 0
    %1044 = vmatprep.mubr.bf16.mxu0 0
    %1045 = vmatmul.mubr.bf16.gmra.mrb[0].mxu0 %v851
    %v1046 = vpop.f32.mrb[0].mxu0
    %v1047 = vadd.f32 0.0, %v1046
    %v1048 = vpop.f32.mrb[0].mxu0
    %v1049 = vadd.f32 0.0, %v1048
    %v1050 = vpop.f32.mrb[0].mxu0
    %v1051 = vpop.f32.mrb[0].mxu0
    %1052 = vdwg.mxu0
    %1053 = vmatprep.subr.bf16.mxu0 0
    %1054 = vmatpush1.bf16.msra.mxu0 %v966
    %1055 = vmatprep.subr.bf16.mxu0 0
    %1056 = vmatpush1.bf16.msra.mxu0 %v969
    %1057 = vmatprep.subr.bf16.mxu0 0
    %1058 = vmatpush1.bf16.msra.mxu0 %v972
    %1059 = vmatprep.subr.bf16.mxu0 0
    %1060 = vmatpush1.bf16.msra.mxu0 %v975
    %1061 = vmatprep.subr.bf16.mxu0 0
    %1062 = vmatpush1.bf16.msra.mxu0 %v978
    %1063 = vmatprep.subr.bf16.mxu0 0
    %1064 = vmatpush1.bf16.msra.mxu0 %v981
    %1065 = vmatprep.subr.bf16.mxu0 0
    %1066 = vmatpush1.bf16.msra.mxu0 %v984
    %1067 = vmatprep.subr.bf16.mxu0 0
    %1068 = vmatpush1.bf16.msra.mxu0 %v987
    %1069 = vmatprep.subr.bf16.mxu0 0
    %1070 = vmatpush1.bf16.msra.mxu0 0
    %1071 = vmatprep.subr.bf16.mxu0 0
    %1072 = vmatpush1.bf16.msra.mxu0 0
    %1073 = vmatprep.subr.bf16.mxu0 0
    %1074 = vmatpush1.bf16.msra.mxu0 0
    %1075 = vmatprep.subr.bf16.mxu0 0
    %1076 = vmatpush1.bf16.msra.mxu0 0
    %1077 = vmatprep.subr.bf16.mxu0 0
    %1078 = vmatpush1.bf16.msra.mxu0 0
    %1079 = vmatprep.subr.bf16.mxu0 0
    %1080 = vmatpush1.bf16.msra.mxu0 0
    %1081 = vmatprep.subr.bf16.mxu0 0
    %1082 = vmatpush1.bf16.msra.mxu0 0
    %1083 = vmatprep.subr.bf16.mxu0 0
    %1084 = vmatpush1.bf16.msra.mxu0 0
    %1085 = vmatprep.mubr.bf16.mxu0 0
    %1086 = vmatmul.mubr.bf16.gmra.mrb[0].mxu0 %v851
    %v1087 = vpop.f32.mrb[0].mxu0
    %v1088 = vadd.f32 0.0, %v1087
    %v1089 = vpop.f32.mrb[0].mxu0
    %v1090 = vpop.f32.mrb[0].mxu0
    %v1091 = vpop.f32.mrb[0].mxu0
    %1092 = vdwg.mxu0
    %v1093 = vadd.f32 %v848, %v1047
    %v1094 = vxor.u32 %v1093, 2147483648
    %v1095 = vmul.f32 %v1094, 1.442695
    %v1096 = vpow.pop %v1095
    %v1097 = vadd.f32 %v1096, 1.0
    %v1098 = vrcp.pop %v1097
    %v1099 = vmul.f32 1.0, %v1098
    %v1100 = vadd.f32 %v849, %v1049
    %v1101 = vxor.u32 %v1100, 2147483648
    %v1102 = vmul.f32 %v1101, 1.442695
    %v1103 = vpow.pop %v1102
    %v1104 = vadd.f32 %v1103, 1.0
    %v1105 = vrcp.pop %v1104
    %v1106 = vmul.f32 1.0, %v1105
    %v1107 = vadd.f32 %v1088, %v288
    %v1108 = vmul.f32 %v1099, %v1107
    %v1109 = vadd.f32 %v850, %v1108
    %v1110 = vtanh.pop %v1109
    %v1111 = vsub.f32 %v844, %v1110
    %v1112 = vmul.f32 %v1106, %v1111
    %v1113 = vadd.f32 %v1110, %v1112
    %vm1114 = vcmp.gt.s32.totalorder %v282, 2
    %v1115 = vsel %vm1114, 1, 0
    %1116 = vset.pattern.permute.xlu0 0
    %1117 = vperm.xlu0 %1116, %v1115
    %v1118 = vpop.permute.xlu0 %1117
    %vm1119 = vcmp.eq.s32.totalorder %v1118, 1
    %v1120 = vsel %vm1119, %v1113, 0.0
    %s1121 = scalar_lea.vmem [#allocation6], 16
    %1122 = vst [vmem:[%s1121] sm:$0xff] %v1120
    %v1123 = vsel %vm1119, %v1113, %v844
    %s1124 = smul.u32 3, 3
    %s1125 = smul.addr %s1124, 8
    %s1126 = scalar_lea.vmem [#allocation2], %s1125
    %v1127 = vld [vmem:[%s1126] sm:$0xff]
    %v1128 = vld [vmem:[%s1126 + $0x8] sm:$0xff]
    %v1129 = vld [vmem:[%s1126 + $0x10] sm:$0xff]
    %v1130 = vpack.c.bf16 %v1123, %v1123
    %v1131 = vld [vmem:[#allocation3] sm:$0xff]
    %v1132 = vld [vmem:[#allocation3 + $0x8] sm:$0xf]
    %v1133 = vld [vmem:[#allocation3 + $0xc] sm:$0xff]
    %v1134 = vld [vmem:[#allocation3 + $0x14] sm:$0xf]
    %v1135 = vld [vmem:[#allocation3 + $0x18] sm:$0xff]
    %v1136 = vld [vmem:[#allocation3 + $0x20] sm:$0xf]
    %v1137 = vld [vmem:[#allocation3 + $0x24] sm:$0xff]
    %v1138 = vld [vmem:[#allocation3 + $0x2c] sm:$0xf]
    %v1139 = vld [vmem:[#allocation3 + $0x30] sm:$0xff]
    %v1140 = vld [vmem:[#allocation3 + $0x38] sm:$0xf]
    %v1141 = vld [vmem:[#allocation3 + $0x3c] sm:$0xff]
    %v1142 = vld [vmem:[#allocation3 + $0x44] sm:$0xf]
    %v1143 = vld [vmem:[#allocation3 + $0x48] sm:$0xff]
    %v1144 = vld [vmem:[#allocation3 + $0x50] sm:$0xf]
    %v1145 = vld [vmem:[#allocation3 + $0x54] sm:$0xff]
    %v1146 = vld [vmem:[#allocation3 + $0x5c] sm:$0xf]
    %v1147 = vld [vmem:[#allocation3 + $0x60] sm:$0xff]
    %v1148 = vld [vmem:[#allocation3 + $0x68] sm:$0xf]
    %v1149 = vld [vmem:[#allocation3 + $0x6c] sm:$0xff]
    %v1150 = vld [vmem:[#allocation3 + $0x74] sm:$0xf]
    %v1151 = vld [vmem:[#allocation3 + $0x78] sm:$0xff]
    %v1152 = vld [vmem:[#allocation3 + $0x80] sm:$0xf]
    %v1153 = vld [vmem:[#allocation3 + $0x84] sm:$0xff]
    %v1154 = vld [vmem:[#allocation3 + $0x8c] sm:$0xf]
    %v1155 = vld [vmem:[#allocation3 + $0x90] sm:$0xff]
    %v1156 = vld [vmem:[#allocation3 + $0x98] sm:$0xf]
    %v1157 = vld [vmem:[#allocation3 + $0x9c] sm:$0xff]
    %v1158 = vld [vmem:[#allocation3 + $0xa4] sm:$0xf]
    %v1159 = vld [vmem:[#allocation3 + $0xa8] sm:$0xff]
    %v1160 = vld [vmem:[#allocation3 + $0xb0] sm:$0xf]
    %v1161 = vld [vmem:[#allocation3 + $0xb4] sm:$0xff]
    %v1162 = vld [vmem:[#allocation3 + $0xbc] sm:$0xf]
    %v1195 = vunpack.c.l.b16 %v1131
    %v1196 = vunpack.c.h.b16 %v1131
    %v1197 = vunpack.c.l.b16 %v1132
    %v1198 = vunpack.c.l.b16 %v1133
    %v1199 = vunpack.c.h.b16 %v1133
    %v1200 = vunpack.c.l.b16 %v1134
    %v1201 = vunpack.c.l.b16 %v1135
    %v1202 = vunpack.c.h.b16 %v1135
    %v1203 = vunpack.c.l.b16 %v1136
    %v1204 = vunpack.c.l.b16 %v1137
    %v1205 = vunpack.c.h.b16 %v1137
    %v1206 = vunpack.c.l.b16 %v1138
    %v1207 = vunpack.c.l.b16 %v1139
    %v1208 = vunpack.c.h.b16 %v1139
    %v1209 = vunpack.c.l.b16 %v1140
    %v1210 = vunpack.c.l.b16 %v1141
    %v1211 = vunpack.c.h.b16 %v1141
    %v1212 = vunpack.c.l.b16 %v1142
    %v1213 = vunpack.c.l.b16 %v1143
    %v1214 = vunpack.c.h.b16 %v1143
    %v1215 = vunpack.c.l.b16 %v1144
    %v1216 = vunpack.c.l.b16 %v1145
    %v1217 = vunpack.c.h.b16 %v1145
    %v1218 = vunpack.c.l.b16 %v1146
    %v1219 = vunpack.c.l.b16 %v1147
    %v1220 = vunpack.c.h.b16 %v1147
    %v1221 = vunpack.c.l.b16 %v1148
    %v1222 = vunpack.c.l.b16 %v1149
    %v1223 = vunpack.c.h.b16 %v1149
    %v1224 = vunpack.c.l.b16 %v1150
    %v1225 = vunpack.c.l.b16 %v1151
    %v1226 = vunpack.c.h.b16 %v1151
    %v1227 = vunpack.c.l.b16 %v1152
    %v1228 = vunpack.c.l.b16 %v1153
    %v1229 = vunpack.c.h.b16 %v1153
    %v1230 = vunpack.c.l.b16 %v1154
    %v1231 = vunpack.c.l.b16 %v1155
    %v1232 = vunpack.c.h.b16 %v1155
    %v1233 = vunpack.c.l.b16 %v1156
    %v1234 = vunpack.c.l.b16 %v1157
    %v1235 = vunpack.c.h.b16 %v1157
    %v1236 = vunpack.c.l.b16 %v1158
    %v1237 = vunpack.c.l.b16 %v1159
    %v1238 = vunpack.c.h.b16 %v1159
    %v1239 = vunpack.c.l.b16 %v1160
    %v1240 = vunpack.c.l.b16 %v1161
    %v1241 = vunpack.c.h.b16 %v1161
    %v1242 = vunpack.c.l.b16 %v1162
    %v1243 = vpack.c.b16 %v1198, %v1195
    %v1244 = vpack.c.b16 %v1199, %v1196
    %v1245 = vpack.c.b16 %v1200, %v1197
    %v1246 = vpack.c.b16 %v1204, %v1201
    %v1247 = vpack.c.b16 %v1205, %v1202
    %v1248 = vpack.c.b16 %v1206, %v1203
    %v1249 = vpack.c.b16 %v1210, %v1207
    %v1250 = vpack.c.b16 %v1211, %v1208
    %v1251 = vpack.c.b16 %v1212, %v1209
    %v1252 = vpack.c.b16 %v1216, %v1213
    %v1253 = vpack.c.b16 %v1217, %v1214
    %v1254 = vpack.c.b16 %v1218, %v1215
    %v1255 = vpack.c.b16 %v1222, %v1219
    %v1256 = vpack.c.b16 %v1223, %v1220
    %v1257 = vpack.c.b16 %v1224, %v1221
    %v1258 = vpack.c.b16 %v1228, %v1225
    %v1259 = vpack.c.b16 %v1229, %v1226
    %v1260 = vpack.c.b16 %v1230, %v1227
    %v1261 = vpack.c.b16 %v1234, %v1231
    %v1262 = vpack.c.b16 %v1235, %v1232
    %v1263 = vpack.c.b16 %v1236, %v1233
    %v1264 = vpack.c.b16 %v1240, %v1237
    %v1265 = vpack.c.b16 %v1241, %v1238
    %v1266 = vpack.c.b16 %v1242, %v1239
    %1291 = vmatprep.subr.bf16.mxu0 %v1244
    %1292 = vmatpush1.bf16.msra.mxu0 %v1243
    %1293 = vmatprep.subr.bf16.mxu0 %v1247
    %1294 = vmatpush1.bf16.msra.mxu0 %v1246
    %1295 = vmatprep.subr.bf16.mxu0 %v1250
    %1296 = vmatpush1.bf16.msra.mxu0 %v1249
    %1297 = vmatprep.subr.bf16.mxu0 %v1253
    %1298 = vmatpush1.bf16.msra.mxu0 %v1252
    %1299 = vmatprep.subr.bf16.mxu0 %v1256
    %1300 = vmatpush1.bf16.msra.mxu0 %v1255
    %1301 = vmatprep.subr.bf16.mxu0 %v1259
    %1302 = vmatpush1.bf16.msra.mxu0 %v1258
    %1303 = vmatprep.subr.bf16.mxu0 %v1262
    %1304 = vmatpush1.bf16.msra.mxu0 %v1261
    %1305 = vmatprep.subr.bf16.mxu0 %v1265
    %1306 = vmatpush1.bf16.msra.mxu0 %v1264
    %1307 = vmatprep.subr.bf16.mxu0 0
    %1308 = vmatpush1.bf16.msra.mxu0 0
    %1309 = vmatprep.subr.bf16.mxu0 0
    %1310 = vmatpush1.bf16.msra.mxu0 0
    %1311 = vmatprep.subr.bf16.mxu0 0
    %1312 = vmatpush1.bf16.msra.mxu0 0
    %1313 = vmatprep.subr.bf16.mxu0 0
    %1314 = vmatpush1.bf16.msra.mxu0 0
    %1315 = vmatprep.subr.bf16.mxu0 0
    %1316 = vmatpush1.bf16.msra.mxu0 0
    %1317 = vmatprep.subr.bf16.mxu0 0
    %1318 = vmatpush1.bf16.msra.mxu0 0
    %1319 = vmatprep.subr.bf16.mxu0 0
    %1320 = vmatpush1.bf16.msra.mxu0 0
    %1321 = vmatprep.subr.bf16.mxu0 0
    %1322 = vmatpush1.bf16.msra.mxu0 0
    %1323 = vmatprep.mubr.bf16.mxu0 0
    %1324 = vmatmul.mubr.bf16.gmra.mrb[0].mxu0 %v1130
    %v1325 = vpop.f32.mrb[0].mxu0
    %v1326 = vadd.f32 0.0, %v1325
    %v1327 = vpop.f32.mrb[0].mxu0
    %v1328 = vadd.f32 0.0, %v1327
    %v1329 = vpop.f32.mrb[0].mxu0
    %v1330 = vpop.f32.mrb[0].mxu0
    %1331 = vdwg.mxu0
    %1332 = vmatprep.subr.bf16.mxu0 0
    %1333 = vmatpush1.bf16.msra.mxu0 %v1245
    %1334 = vmatprep.subr.bf16.mxu0 0
    %1335 = vmatpush1.bf16.msra.mxu0 %v1248
    %1336 = vmatprep.subr.bf16.mxu0 0
    %1337 = vmatpush1.bf16.msra.mxu0 %v1251
    %1338 = vmatprep.subr.bf16.mxu0 0
    %1339 = vmatpush1.bf16.msra.mxu0 %v1254
    %1340 = vmatprep.subr.bf16.mxu0 0
    %1341 = vmatpush1.bf16.msra.mxu0 %v1257
    %1342 = vmatprep.subr.bf16.mxu0 0
    %1343 = vmatpush1.bf16.msra.mxu0 %v1260
    %1344 = vmatprep.subr.bf16.mxu0 0
    %1345 = vmatpush1.bf16.msra.mxu0 %v1263
    %1346 = vmatprep.subr.bf16.mxu0 0
    %1347 = vmatpush1.bf16.msra.mxu0 %v1266
    %1348 = vmatprep.subr.bf16.mxu0 0
    %1349 = vmatpush1.bf16.msra.mxu0 0
    %1350 = vmatprep.subr.bf16.mxu0 0
    %1351 = vmatpush1.bf16.msra.mxu0 0
    %1352 = vmatprep.subr.bf16.mxu0 0
    %1353 = vmatpush1.bf16.msra.mxu0 0
    %1354 = vmatprep.subr.bf16.mxu0 0
    %1355 = vmatpush1.bf16.msra.mxu0 0
    %1356 = vmatprep.subr.bf16.mxu0 0
    %1357 = vmatpush1.bf16.msra.mxu0 0
    %1358 = vmatprep.subr.bf16.mxu0 0
    %1359 = vmatpush1.bf16.msra.mxu0 0
    %1360 = vmatprep.subr.bf16.mxu0 0
    %1361 = vmatpush1.bf16.msra.mxu0 0
    %1362 = vmatprep.subr.bf16.mxu0 0
    %1363 = vmatpush1.bf16.msra.mxu0 0
    %1364 = vmatprep.mubr.bf16.mxu0 0
    %1365 = vmatmul.mubr.bf16.gmra.mrb[0].mxu0 %v1130
    %v1366 = vpop.f32.mrb[0].mxu0
    %v1367 = vadd.f32 0.0, %v1366
    %v1368 = vpop.f32.mrb[0].mxu0
    %v1369 = vpop.f32.mrb[0].mxu0
    %v1370 = vpop.f32.mrb[0].mxu0
    %1371 = vdwg.mxu0
    %v1372 = vadd.f32 %v1127, %v1326
    %v1373 = vxor.u32 %v1372, 2147483648
    %v1374 = vmul.f32 %v1373, 1.442695
    %v1375 = vpow.pop %v1374
    %v1376 = vadd.f32 %v1375, 1.0
    %v1377 = vrcp.pop %v1376
    %v1378 = vmul.f32 1.0, %v1377
    %v1379 = vadd.f32 %v1128, %v1328
    %v1380 = vxor.u32 %v1379, 2147483648
    %v1381 = vmul.f32 %v1380, 1.442695
    %v1382 = vpow.pop %v1381
    %v1383 = vadd.f32 %v1382, 1.0
    %v1384 = vrcp.pop %v1383
    %v1385 = vmul.f32 1.0, %v1384
    %v1386 = vadd.f32 %v1367, %v288
    %v1387 = vmul.f32 %v1378, %v1386
    %v1388 = vadd.f32 %v1129, %v1387
    %v1389 = vtanh.pop %v1388
    %v1390 = vsub.f32 %v1123, %v1389
    %v1391 = vmul.f32 %v1385, %v1390
    %v1392 = vadd.f32 %v1389, %v1391
    %vm1393 = vcmp.gt.s32.totalorder %v282, 3
    %v1394 = vsel %vm1393, 1, 0
    %1395 = vset.pattern.permute.xlu0 0
    %1396 = vperm.xlu0 %1395, %v1394
    %v1397 = vpop.permute.xlu0 %1396
    %vm1398 = vcmp.eq.s32.totalorder %v1397, 1
    %v1399 = vsel %vm1398, %v1392, 0.0
    %s1400 = scalar_lea.vmem [#allocation6], 24
    %1401 = vst [vmem:[%s1400] sm:$0xff] %v1399
    %v1402 = vsel %vm1398, %v1392, %v1123
    %s1403 = smul.u32 4, 3
    %s1404 = smul.addr %s1403, 8
    %s1405 = scalar_lea.vmem [#allocation2], %s1404
    %v1406 = vld [vmem:[%s1405] sm:$0xff]
    %v1407 = vld [vmem:[%s1405 + $0x8] sm:$0xff]
    %v1408 = vld [vmem:[%s1405 + $0x10] sm:$0xff]
    %v1409 = vpack.c.bf16 %v1402, %v1402
    %v1410 = vld [vmem:[#allocation3] sm:$0xff]
    %v1411 = vld [vmem:[#allocation3 + $0x8] sm:$0xf]
    %v1412 = vld [vmem:[#allocation3 + $0xc] sm:$0xff]
    %v1413 = vld [vmem:[#allocation3 + $0x14] sm:$0xf]
    %v1414 = vld [vmem:[#allocation3 + $0x18] sm:$0xff]
    %v1415 = vld [vmem:[#allocation3 + $0x20] sm:$0xf]
    %v1416 = vld [vmem:[#allocation3 + $0x24] sm:$0xff]
    %v1417 = vld [vmem:[#allocation3 + $0x2c] sm:$0xf]
    %v1418 = vld [vmem:[#allocation3 + $0x30] sm:$0xff]
    %v1419 = vld [vmem:[#allocation3 + $0x38] sm:$0xf]
    %v1420 = vld [vmem:[#allocation3 + $0x3c] sm:$0xff]
    %v1421 = vld [vmem:[#allocation3 + $0x44] sm:$0xf]
    %v1422 = vld [vmem:[#allocation3 + $0x48] sm:$0xff]
    %v1423 = vld [vmem:[#allocation3 + $0x50] sm:$0xf]
    %v1424 = vld [vmem:[#allocation3 + $0x54] sm:$0xff]
    %v1425 = vld [vmem:[#allocation3 + $0x5c] sm:$0xf]
    %v1426 = vld [vmem:[#allocation3 + $0x60] sm:$0xff]
    %v1427 = vld [vmem:[#allocation3 + $0x68] sm:$0xf]
    %v1428 = vld [vmem:[#allocation3 + $0x6c] sm:$0xff]
    %v1429 = vld [vmem:[#allocation3 + $0x74] sm:$0xf]
    %v1430 = vld [vmem:[#allocation3 + $0x78] sm:$0xff]
    %v1431 = vld [vmem:[#allocation3 + $0x80] sm:$0xf]
    %v1432 = vld [vmem:[#allocation3 + $0x84] sm:$0xff]
    %v1433 = vld [vmem:[#allocation3 + $0x8c] sm:$0xf]
    %v1434 = vld [vmem:[#allocation3 + $0x90] sm:$0xff]
    %v1435 = vld [vmem:[#allocation3 + $0x98] sm:$0xf]
    %v1436 = vld [vmem:[#allocation3 + $0x9c] sm:$0xff]
    %v1437 = vld [vmem:[#allocation3 + $0xa4] sm:$0xf]
    %v1438 = vld [vmem:[#allocation3 + $0xa8] sm:$0xff]
    %v1439 = vld [vmem:[#allocation3 + $0xb0] sm:$0xf]
    %v1440 = vld [vmem:[#allocation3 + $0xb4] sm:$0xff]
    %v1441 = vld [vmem:[#allocation3 + $0xbc] sm:$0xf]
    %v1474 = vunpack.c.l.b16 %v1410
    %v1475 = vunpack.c.h.b16 %v1410
    %v1476 = vunpack.c.l.b16 %v1411
    %v1477 = vunpack.c.l.b16 %v1412
    %v1478 = vunpack.c.h.b16 %v1412
    %v1479 = vunpack.c.l.b16 %v1413
    %v1480 = vunpack.c.l.b16 %v1414
    %v1481 = vunpack.c.h.b16 %v1414
    %v1482 = vunpack.c.l.b16 %v1415
    %v1483 = vunpack.c.l.b16 %v1416
    %v1484 = vunpack.c.h.b16 %v1416
    %v1485 = vunpack.c.l.b16 %v1417
    %v1486 = vunpack.c.l.b16 %v1418
    %v1487 = vunpack.c.h.b16 %v1418
    %v1488 = vunpack.c.l.b16 %v1419
    %v1489 = vunpack.c.l.b16 %v1420
    %v1490 = vunpack.c.h.b16 %v1420
    %v1491 = vunpack.c.l.b16 %v1421
    %v1492 = vunpack.c.l.b16 %v1422
    %v1493 = vunpack.c.h.b16 %v1422
    %v1494 = vunpack.c.l.b16 %v1423
    %v1495 = vunpack.c.l.b16 %v1424
    %v1496 = vunpack.c.h.b16 %v1424
    %v1497 = vunpack.c.l.b16 %v1425
    %v1498 = vunpack.c.l.b16 %v1426
    %v1499 = vunpack.c.h.b16 %v1426
    %v1500 = vunpack.c.l.b16 %v1427
    %v1501 = vunpack.c.l.b16 %v1428
    %v1502 = vunpack.c.h.b16 %v1428
    %v1503 = vunpack.c.l.b16 %v1429
    %v1504 = vunpack.c.l.b16 %v1430
    %v1505 = vunpack.c.h.b16 %v1430
    %v1506 = vunpack.c.l.b16 %v1431
    %v1507 = vunpack.c.l.b16 %v1432
    %v1508 = vunpack.c.h.b16 %v1432
    %v1509 = vunpack.c.l.b16 %v1433
    %v1510 = vunpack.c.l.b16 %v1434
    %v1511 = vunpack.c.h.b16 %v1434
    %v1512 = vunpack.c.l.b16 %v1435
    %v1513 = vunpack.c.l.b16 %v1436
    %v1514 = vunpack.c.h.b16 %v1436
    %v1515 = vunpack.c.l.b16 %v1437
    %v1516 = vunpack.c.l.b16 %v1438
    %v1517 = vunpack.c.h.b16 %v1438
    %v1518 = vunpack.c.l.b16 %v1439
    %v1519 = vunpack.c.l.b16 %v1440
    %v1520 = vunpack.c.h.b16 %v1440
    %v1521 = vunpack.c.l.b16 %v1441
    %v1522 = vpack.c.b16 %v1477, %v1474
    %v1523 = vpack.c.b16 %v1478, %v1475
    %v1524 = vpack.c.b16 %v1479, %v1476
    %v1525 = vpack.c.b16 %v1483, %v1480
    %v1526 = vpack.c.b16 %v1484, %v1481
    %v1527 = vpack.c.b16 %v1485, %v1482
    %v1528 = vpack.c.b16 %v1489, %v1486
    %v1529 = vpack.c.b16 %v1490, %v1487
    %v1530 = vpack.c.b16 %v1491, %v1488
    %v1531 = vpack.c.b16 %v1495, %v1492
    %v1532 = vpack.c.b16 %v1496, %v1493
    %v1533 = vpack.c.b16 %v1497, %v1494
    %v1534 = vpack.c.b16 %v1501, %v1498
    %v1535 = vpack.c.b16 %v1502, %v1499
    %v1536 = vpack.c.b16 %v1503, %v1500
    %v1537 = vpack.c.b16 %v1507, %v1504
    %v1538 = vpack.c.b16 %v1508, %v1505
    %v1539 = vpack.c.b16 %v1509, %v1506
    %v1540 = vpack.c.b16 %v1513, %v1510
    %v1541 = vpack.c.b16 %v1514, %v1511
    %v1542 = vpack.c.b16 %v1515, %v1512
    %v1543 = vpack.c.b16 %v1519, %v1516
    %v1544 = vpack.c.b16 %v1520, %v1517
    %v1545 = vpack.c.b16 %v1521, %v1518
    %1570 = vmatprep.subr.bf16.mxu0 %v1523
    %1571 = vmatpush1.bf16.msra.mxu0 %v1522
    %1572 = vmatprep.subr.bf16.mxu0 %v1526
    %1573 = vmatpush1.bf16.msra.mxu0 %v1525
    %1574 = vmatprep.subr.bf16.mxu0 %v1529
    %1575 = vmatpush1.bf16.msra.mxu0 %v1528
    %1576 = vmatprep.subr.bf16.mxu0 %v1532
    %1577 = vmatpush1.bf16.msra.mxu0 %v1531
    %1578 = vmatprep.subr.bf16.mxu0 %v1535
    %1579 = vmatpush1.bf16.msra.mxu0 %v1534
    %1580 = vmatprep.subr.bf16.mxu0 %v1538
    %1581 = vmatpush1.bf16.msra.mxu0 %v1537
    %1582 = vmatprep.subr.bf16.mxu0 %v1541
    %1583 = vmatpush1.bf16.msra.mxu0 %v1540
    %1584 = vmatprep.subr.bf16.mxu0 %v1544
    %1585 = vmatpush1.bf16.msra.mxu0 %v1543
    %1586 = vmatprep.subr.bf16.mxu0 0
    %1587 = vmatpush1.bf16.msra.mxu0 0
    %1588 = vmatprep.subr.bf16.mxu0 0
    %1589 = vmatpush1.bf16.msra.mxu0 0
    %1590 = vmatprep.subr.bf16.mxu0 0
    %1591 = vmatpush1.bf16.msra.mxu0 0
    %1592 = vmatprep.subr.bf16.mxu0 0
    %1593 = vmatpush1.bf16.msra.mxu0 0
    %1594 = vmatprep.subr.bf16.mxu0 0
    %1595 = vmatpush1.bf16.msra.mxu0 0
    %1596 = vmatprep.subr.bf16.mxu0 0
    %1597 = vmatpush1.bf16.msra.mxu0 0
    %1598 = vmatprep.subr.bf16.mxu0 0
    %1599 = vmatpush1.bf16.msra.mxu0 0
    %1600 = vmatprep.subr.bf16.mxu0 0
    %1601 = vmatpush1.bf16.msra.mxu0 0
    %1602 = vmatprep.mubr.bf16.mxu0 0
    %1603 = vmatmul.mubr.bf16.gmra.mrb[0].mxu0 %v1409
    %v1604 = vpop.f32.mrb[0].mxu0
    %v1605 = vadd.f32 0.0, %v1604
    %v1606 = vpop.f32.mrb[0].mxu0
    %v1607 = vadd.f32 0.0, %v1606
    %v1608 = vpop.f32.mrb[0].mxu0
    %v1609 = vpop.f32.mrb[0].mxu0
    %1610 = vdwg.mxu0
    %1611 = vmatprep.subr.bf16.mxu0 0
    %1612 = vmatpush1.bf16.msra.mxu0 %v1524
    %1613 = vmatprep.subr.bf16.mxu0 0
    %1614 = vmatpush1.bf16.msra.mxu0 %v1527
    %1615 = vmatprep.subr.bf16.mxu0 0
    %1616 = vmatpush1.bf16.msra.mxu0 %v1530
    %1617 = vmatprep.subr.bf16.mxu0 0
    %1618 = vmatpush1.bf16.msra.mxu0 %v1533
    %1619 = vmatprep.subr.bf16.mxu0 0
    %1620 = vmatpush1.bf16.msra.mxu0 %v1536
    %1621 = vmatprep.subr.bf16.mxu0 0
    %1622 = vmatpush1.bf16.msra.mxu0 %v1539
    %1623 = vmatprep.subr.bf16.mxu0 0
    %1624 = vmatpush1.bf16.msra.mxu0 %v1542
    %1625 = vmatprep.subr.bf16.mxu0 0
    %1626 = vmatpush1.bf16.msra.mxu0 %v1545
    %1627 = vmatprep.subr.bf16.mxu0 0
    %1628 = vmatpush1.bf16.msra.mxu0 0
    %1629 = vmatprep.subr.bf16.mxu0 0
    %1630 = vmatpush1.bf16.msra.mxu0 0
    %1631 = vmatprep.subr.bf16.mxu0 0
    %1632 = vmatpush1.bf16.msra.mxu0 0
    %1633 = vmatprep.subr.bf16.mxu0 0
    %1634 = vmatpush1.bf16.msra.mxu0 0
    %1635 = vmatprep.subr.bf16.mxu0 0
    %1636 = vmatpush1.bf16.msra.mxu0 0
    %1637 = vmatprep.subr.bf16.mxu0 0
    %1638 = vmatpush1.bf16.msra.mxu0 0
    %1639 = vmatprep.subr.bf16.mxu0 0
    %1640 = vmatpush1.bf16.msra.mxu0 0
    %1641 = vmatprep.subr.bf16.mxu0 0
    %1642 = vmatpush1.bf16.msra.mxu0 0
    %1643 = vmatprep.mubr.bf16.mxu0 0
    %1644 = vmatmul.mubr.bf16.gmra.mrb[0].mxu0 %v1409
    %v1645 = vpop.f32.mrb[0].mxu0
    %v1646 = vadd.f32 0.0, %v1645
    %v1647 = vpop.f32.mrb[0].mxu0
    %v1648 = vpop.f32.mrb[0].mxu0
    %v1649 = vpop.f32.mrb[0].mxu0
    %1650 = vdwg.mxu0
    %v1651 = vadd.f32 %v1406, %v1605
    %v1652 = vxor.u32 %v1651, 2147483648
    %v1653 = vmul.f32 %v1652, 1.442695
    %v1654 = vpow.pop %v1653
    %v1655 = vadd.f32 %v1654, 1.0
    %v1656 = vrcp.pop %v1655
    %v1657 = vmul.f32 1.0, %v1656
    %v1658 = vadd.f32 %v1407, %v1607
    %v1659 = vxor.u32 %v1658, 2147483648
    %v1660 = vmul.f32 %v1659, 1.442695
    %v1661 = vpow.pop %v1660
    %v1662 = vadd.f32 %v1661, 1.0
    %v1663 = vrcp.pop %v1662
    %v1664 = vmul.f32 1.0, %v1663
    %v1665 = vadd.f32 %v1646, %v288
    %v1666 = vmul.f32 %v1657, %v1665
    %v1667 = vadd.f32 %v1408, %v1666
    %v1668 = vtanh.pop %v1667
    %v1669 = vsub.f32 %v1402, %v1668
    %v1670 = vmul.f32 %v1664, %v1669
    %v1671 = vadd.f32 %v1668, %v1670
    %vm1672 = vcmp.gt.s32.totalorder %v282, 4
    %v1673 = vsel %vm1672, 1, 0
    %1674 = vset.pattern.permute.xlu0 0
    %1675 = vperm.xlu0 %1674, %v1673
    %v1676 = vpop.permute.xlu0 %1675
    %vm1677 = vcmp.eq.s32.totalorder %v1676, 1
    %v1678 = vsel %vm1677, %v1671, 0.0
    %s1679 = scalar_lea.vmem [#allocation6], 32
    %1680 = vst [vmem:[%s1679] sm:$0xff] %v1678
    %v1681 = vsel %vm1677, %v1671, %v1402
    %s1682 = smul.u32 5, 3
    %s1683 = smul.addr %s1682, 8
    %s1684 = scalar_lea.vmem [#allocation2], %s1683
    %v1685 = vld [vmem:[%s1684] sm:$0xff]
    %v1686 = vld [vmem:[%s1684 + $0x8] sm:$0xff]
    %v1687 = vld [vmem:[%s1684 + $0x10] sm:$0xff]
    %v1688 = vpack.c.bf16 %v1681, %v1681
    %v1689 = vld [vmem:[#allocation3] sm:$0xff]
    %v1690 = vld [vmem:[#allocation3 + $0x8] sm:$0xf]
    %v1691 = vld [vmem:[#allocation3 + $0xc] sm:$0xff]
    %v1692 = vld [vmem:[#allocation3 + $0x14] sm:$0xf]
    %v1693 = vld [vmem:[#allocation3 + $0x18] sm:$0xff]
    %v1694 = vld [vmem:[#allocation3 + $0x20] sm:$0xf]
    %v1695 = vld [vmem:[#allocation3 + $0x24] sm:$0xff]
    %v1696 = vld [vmem:[#allocation3 + $0x2c] sm:$0xf]
    %v1697 = vld [vmem:[#allocation3 + $0x30] sm:$0xff]
    %v1698 = vld [vmem:[#allocation3 + $0x38] sm:$0xf]
    %v1699 = vld [vmem:[#allocation3 + $0x3c] sm:$0xff]
    %v1700 = vld [vmem:[#allocation3 + $0x44] sm:$0xf]
    %v1701 = vld [vmem:[#allocation3 + $0x48] sm:$0xff]
    %v1702 = vld [vmem:[#allocation3 + $0x50] sm:$0xf]
    %v1703 = vld [vmem:[#allocation3 + $0x54] sm:$0xff]
    %v1704 = vld [vmem:[#allocation3 + $0x5c] sm:$0xf]
    %v1705 = vld [vmem:[#allocation3 + $0x60] sm:$0xff]
    %v1706 = vld [vmem:[#allocation3 + $0x68] sm:$0xf]
    %v1707 = vld [vmem:[#allocation3 + $0x6c] sm:$0xff]
    %v1708 = vld [vmem:[#allocation3 + $0x74] sm:$0xf]
    %v1709 = vld [vmem:[#allocation3 + $0x78] sm:$0xff]
    %v1710 = vld [vmem:[#allocation3 + $0x80] sm:$0xf]
    %v1711 = vld [vmem:[#allocation3 + $0x84] sm:$0xff]
    %v1712 = vld [vmem:[#allocation3 + $0x8c] sm:$0xf]
    %v1713 = vld [vmem:[#allocation3 + $0x90] sm:$0xff]
    %v1714 = vld [vmem:[#allocation3 + $0x98] sm:$0xf]
    %v1715 = vld [vmem:[#allocation3 + $0x9c] sm:$0xff]
    %v1716 = vld [vmem:[#allocation3 + $0xa4] sm:$0xf]
    %v1717 = vld [vmem:[#allocation3 + $0xa8] sm:$0xff]
    %v1718 = vld [vmem:[#allocation3 + $0xb0] sm:$0xf]
    %v1719 = vld [vmem:[#allocation3 + $0xb4] sm:$0xff]
    %v1720 = vld [vmem:[#allocation3 + $0xbc] sm:$0xf]
    %v1753 = vunpack.c.l.b16 %v1689
    %v1754 = vunpack.c.h.b16 %v1689
    %v1755 = vunpack.c.l.b16 %v1690
    %v1756 = vunpack.c.l.b16 %v1691
    %v1757 = vunpack.c.h.b16 %v1691
    %v1758 = vunpack.c.l.b16 %v1692
    %v1759 = vunpack.c.l.b16 %v1693
    %v1760 = vunpack.c.h.b16 %v1693
    %v1761 = vunpack.c.l.b16 %v1694
    %v1762 = vunpack.c.l.b16 %v1695
    %v1763 = vunpack.c.h.b16 %v1695
    %v1764 = vunpack.c.l.b16 %v1696
    %v1765 = vunpack.c.l.b16 %v1697
    %v1766 = vunpack.c.h.b16 %v1697
    %v1767 = vunpack.c.l.b16 %v1698
    %v1768 = vunpack.c.l.b16 %v1699
    %v1769 = vunpack.c.h.b16 %v1699
    %v1770 = vunpack.c.l.b16 %v1700
    %v1771 = vunpack.c.l.b16 %v1701
    %v1772 = vunpack.c.h.b16 %v1701
    %v1773 = vunpack.c.l.b16 %v1702
    %v1774 = vunpack.c.l.b16 %v1703
    %v1775 = vunpack.c.h.b16 %v1703
    %v1776 = vunpack.c.l.b16 %v1704
    %v1777 = vunpack.c.l.b16 %v1705
    %v1778 = vunpack.c.h.b16 %v1705
    %v1779 = vunpack.c.l.b16 %v1706
    %v1780 = vunpack.c.l.b16 %v1707
    %v1781 = vunpack.c.h.b16 %v1707
    %v1782 = vunpack.c.l.b16 %v1708
    %v1783 = vunpack.c.l.b16 %v1709
    %v1784 = vunpack.c.h.b16 %v1709
    %v1785 = vunpack.c.l.b16 %v1710
    %v1786 = vunpack.c.l.b16 %v1711
    %v1787 = vunpack.c.h.b16 %v1711
    %v1788 = vunpack.c.l.b16 %v1712
    %v1789 = vunpack.c.l.b16 %v1713
    %v1790 = vunpack.c.h.b16 %v1713
    %v1791 = vunpack.c.l.b16 %v1714
    %v1792 = vunpack.c.l.b16 %v1715
    %v1793 = vunpack.c.h.b16 %v1715
    %v1794 = vunpack.c.l.b16 %v1716
    %v1795 = vunpack.c.l.b16 %v1717
    %v1796 = vunpack.c.h.b16 %v1717
    %v1797 = vunpack.c.l.b16 %v1718
    %v1798 = vunpack.c.l.b16 %v1719
    %v1799 = vunpack.c.h.b16 %v1719
    %v1800 = vunpack.c.l.b16 %v1720
    %v1801 = vpack.c.b16 %v1756, %v1753
    %v1802 = vpack.c.b16 %v1757, %v1754
    %v1803 = vpack.c.b16 %v1758, %v1755
    %v1804 = vpack.c.b16 %v1762, %v1759
    %v1805 = vpack.c.b16 %v1763, %v1760
    %v1806 = vpack.c.b16 %v1764, %v1761
    %v1807 = vpack.c.b16 %v1768, %v1765
    %v1808 = vpack.c.b16 %v1769, %v1766
    %v1809 = vpack.c.b16 %v1770, %v1767
    %v1810 = vpack.c.b16 %v1774, %v1771
    %v1811 = vpack.c.b16 %v1775, %v1772
    %v1812 = vpack.c.b16 %v1776, %v1773
    %v1813 = vpack.c.b16 %v1780, %v1777
    %v1814 = vpack.c.b16 %v1781, %v1778
    %v1815 = vpack.c.b16 %v1782, %v1779
    %v1816 = vpack.c.b16 %v1786, %v1783
    %v1817 = vpack.c.b16 %v1787, %v1784
    %v1818 = vpack.c.b16 %v1788, %v1785
    %v1819 = vpack.c.b16 %v1792, %v1789
    %v1820 = vpack.c.b16 %v1793, %v1790
    %v1821 = vpack.c.b16 %v1794, %v1791
    %v1822 = vpack.c.b16 %v1798, %v1795
    %v1823 = vpack.c.b16 %v1799, %v1796
    %v1824 = vpack.c.b16 %v1800, %v1797
    %1849 = vmatprep.subr.bf16.mxu0 %v1802
    %1850 = vmatpush1.bf16.msra.mxu0 %v1801
    %1851 = vmatprep.subr.bf16.mxu0 %v1805
    %1852 = vmatpush1.bf16.msra.mxu0 %v1804
    %1853 = vmatprep.subr.bf16.mxu0 %v1808
    %1854 = vmatpush1.bf16.msra.mxu0 %v1807
    %1855 = vmatprep.subr.bf16.mxu0 %v1811
    %1856 = vmatpush1.bf16.msra.mxu0 %v1810
    %1857 = vmatprep.subr.bf16.mxu0 %v1814
    %1858 = vmatpush1.bf16.msra.mxu0 %v1813
    %1859 = vmatprep.subr.bf16.mxu0 %v1817
    %1860 = vmatpush1.bf16.msra.mxu0 %v1816
    %1861 = vmatprep.subr.bf16.mxu0 %v1820
    %1862 = vmatpush1.bf16.msra.mxu0 %v1819
    %1863 = vmatprep.subr.bf16.mxu0 %v1823
    %1864 = vmatpush1.bf16.msra.mxu0 %v1822
    %1865 = vmatprep.subr.bf16.mxu0 0
    %1866 = vmatpush1.bf16.msra.mxu0 0
    %1867 = vmatprep.subr.bf16.mxu0 0
    %1868 = vmatpush1.bf16.msra.mxu0 0
    %1869 = vmatprep.subr.bf16.mxu0 0
    %1870 = vmatpush1.bf16.msra.mxu0 0
    %1871 = vmatprep.subr.bf16.mxu0 0
    %1872 = vmatpush1.bf16.msra.mxu0 0
    %1873 = vmatprep.subr.bf16.mxu0 0
    %1874 = vmatpush1.bf16.msra.mxu0 0
    %1875 = vmatprep.subr.bf16.mxu0 0
    %1876 = vmatpush1.bf16.msra.mxu0 0
    %1877 = vmatprep.subr.bf16.mxu0 0
    %1878 = vmatpush1.bf16.msra.mxu0 0
    %1879 = vmatprep.subr.bf16.mxu0 0
    %1880 = vmatpush1.bf16.msra.mxu0 0
    %1881 = vmatprep.mubr.bf16.mxu0 0
    %1882 = vmatmul.mubr.bf16.gmra.mrb[0].mxu0 %v1688
    %v1883 = vpop.f32.mrb[0].mxu0
    %v1884 = vadd.f32 0.0, %v1883
    %v1885 = vpop.f32.mrb[0].mxu0
    %v1886 = vadd.f32 0.0, %v1885
    %v1887 = vpop.f32.mrb[0].mxu0
    %v1888 = vpop.f32.mrb[0].mxu0
    %1889 = vdwg.mxu0
    %1890 = vmatprep.subr.bf16.mxu0 0
    %1891 = vmatpush1.bf16.msra.mxu0 %v1803
    %1892 = vmatprep.subr.bf16.mxu0 0
    %1893 = vmatpush1.bf16.msra.mxu0 %v1806
    %1894 = vmatprep.subr.bf16.mxu0 0
    %1895 = vmatpush1.bf16.msra.mxu0 %v1809
    %1896 = vmatprep.subr.bf16.mxu0 0
    %1897 = vmatpush1.bf16.msra.mxu0 %v1812
    %1898 = vmatprep.subr.bf16.mxu0 0
    %1899 = vmatpush1.bf16.msra.mxu0 %v1815
    %1900 = vmatprep.subr.bf16.mxu0 0
    %1901 = vmatpush1.bf16.msra.mxu0 %v1818
    %1902 = vmatprep.subr.bf16.mxu0 0
    %1903 = vmatpush1.bf16.msra.mxu0 %v1821
    %1904 = vmatprep.subr.bf16.mxu0 0
    %1905 = vmatpush1.bf16.msra.mxu0 %v1824
    %1906 = vmatprep.subr.bf16.mxu0 0
    %1907 = vmatpush1.bf16.msra.mxu0 0
    %1908 = vmatprep.subr.bf16.mxu0 0
    %1909 = vmatpush1.bf16.msra.mxu0 0
    %1910 = vmatprep.subr.bf16.mxu0 0
    %1911 = vmatpush1.bf16.msra.mxu0 0
    %1912 = vmatprep.subr.bf16.mxu0 0
    %1913 = vmatpush1.bf16.msra.mxu0 0
    %1914 = vmatprep.subr.bf16.mxu0 0
    %1915 = vmatpush1.bf16.msra.mxu0 0
    %1916 = vmatprep.subr.bf16.mxu0 0
    %1917 = vmatpush1.bf16.msra.mxu0 0
    %1918 = vmatprep.subr.bf16.mxu0 0
    %1919 = vmatpush1.bf16.msra.mxu0 0
    %1920 = vmatprep.subr.bf16.mxu0 0
    %1921 = vmatpush1.bf16.msra.mxu0 0
    %1922 = vmatprep.mubr.bf16.mxu0 0
    %1923 = vmatmul.mubr.bf16.gmra.mrb[0].mxu0 %v1688
    %v1924 = vpop.f32.mrb[0].mxu0
    %v1925 = vadd.f32 0.0, %v1924
    %v1926 = vpop.f32.mrb[0].mxu0
    %v1927 = vpop.f32.mrb[0].mxu0
    %v1928 = vpop.f32.mrb[0].mxu0
    %1929 = vdwg.mxu0
    %v1930 = vadd.f32 %v1685, %v1884
    %v1931 = vxor.u32 %v1930, 2147483648
    %v1932 = vmul.f32 %v1931, 1.442695
    %v1933 = vpow.pop %v1932
    %v1934 = vadd.f32 %v1933, 1.0
    %v1935 = vrcp.pop %v1934
    %v1936 = vmul.f32 1.0, %v1935
    %v1937 = vadd.f32 %v1686, %v1886
    %v1938 = vxor.u32 %v1937, 2147483648
    %v1939 = vmul.f32 %v1938, 1.442695
    %v1940 = vpow.pop %v1939
    %v1941 = vadd.f32 %v1940, 1.0
    %v1942 = vrcp.pop %v1941
    %v1943 = vmul.f32 1.0, %v1942
    %v1944 = vadd.f32 %v1925, %v288
    %v1945 = vmul.f32 %v1936, %v1944
    %v1946 = vadd.f32 %v1687, %v1945
    %v1947 = vtanh.pop %v1946
    %v1948 = vsub.f32 %v1681, %v1947
    %v1949 = vmul.f32 %v1943, %v1948
    %v1950 = vadd.f32 %v1947, %v1949
    %vm1951 = vcmp.gt.s32.totalorder %v282, 5
    %v1952 = vsel %vm1951, 1, 0
    %1953 = vset.pattern.permute.xlu0 0
    %1954 = vperm.xlu0 %1953, %v1952
    %v1955 = vpop.permute.xlu0 %1954
    %vm1956 = vcmp.eq.s32.totalorder %v1955, 1
    %v1957 = vsel %vm1956, %v1950, 0.0
    %s1958 = scalar_lea.vmem [#allocation6], 40
    %1959 = vst [vmem:[%s1958] sm:$0xff] %v1957
    %v1960 = vsel %vm1956, %v1950, %v1681
    %s1961 = smul.u32 6, 3
    %s1962 = smul.addr %s1961, 8
    %s1963 = scalar_lea.vmem [#allocation2], %s1962
    %v1964 = vld [vmem:[%s1963] sm:$0xff]
    %v1965 = vld [vmem:[%s1963 + $0x8] sm:$0xff]
    %v1966 = vld [vmem:[%s1963 + $0x10] sm:$0xff]
    %v1967 = vpack.c.bf16 %v1960, %v1960
    %v1968 = vld [vmem:[#allocation3] sm:$0xff]
    %v1969 = vld [vmem:[#allocation3 + $0x8] sm:$0xf]
    %v1970 = vld [vmem:[#allocation3 + $0xc] sm:$0xff]
    %v1971 = vld [vmem:[#allocation3 + $0x14] sm:$0xf]
    %v1972 = vld [vmem:[#allocation3 + $0x18] sm:$0xff]
    %v1973 = vld [vmem:[#allocation3 + $0x20] sm:$0xf]
    %v1974 = vld [vmem:[#allocation3 + $0x24] sm:$0xff]
    %v1975 = vld [vmem:[#allocation3 + $0x2c] sm:$0xf]
    %v1976 = vld [vmem:[#allocation3 + $0x30] sm:$0xff]
    %v1977 = vld [vmem:[#allocation3 + $0x38] sm:$0xf]
    %v1978 = vld [vmem:[#allocation3 + $0x3c] sm:$0xff]
    %v1979 = vld [vmem:[#allocation3 + $0x44] sm:$0xf]
    %v1980 = vld [vmem:[#allocation3 + $0x48] sm:$0xff]
    %v1981 = vld [vmem:[#allocation3 + $0x50] sm:$0xf]
    %v1982 = vld [vmem:[#allocation3 + $0x54] sm:$0xff]
    %v1983 = vld [vmem:[#allocation3 + $0x5c] sm:$0xf]
    %v1984 = vld [vmem:[#allocation3 + $0x60] sm:$0xff]
    %v1985 = vld [vmem:[#allocation3 + $0x68] sm:$0xf]
    %v1986 = vld [vmem:[#allocation3 + $0x6c] sm:$0xff]
    %v1987 = vld [vmem:[#allocation3 + $0x74] sm:$0xf]
    %v1988 = vld [vmem:[#allocation3 + $0x78] sm:$0xff]
    %v1989 = vld [vmem:[#allocation3 + $0x80] sm:$0xf]
    %v1990 = vld [vmem:[#allocation3 + $0x84] sm:$0xff]
    %v1991 = vld [vmem:[#allocation3 + $0x8c] sm:$0xf]
    %v1992 = vld [vmem:[#allocation3 + $0x90] sm:$0xff]
    %v1993 = vld [vmem:[#allocation3 + $0x98] sm:$0xf]
    %v1994 = vld [vmem:[#allocation3 + $0x9c] sm:$0xff]
    %v1995 = vld [vmem:[#allocation3 + $0xa4] sm:$0xf]
    %v1996 = vld [vmem:[#allocation3 + $0xa8] sm:$0xff]
    %v1997 = vld [vmem:[#allocation3 + $0xb0] sm:$0xf]
    %v1998 = vld [vmem:[#allocation3 + $0xb4] sm:$0xff]
    %v1999 = vld [vmem:[#allocation3 + $0xbc] sm:$0xf]
    %v2032 = vunpack.c.l.b16 %v1968
    %v2033 = vunpack.c.h.b16 %v1968
    %v2034 = vunpack.c.l.b16 %v1969
    %v2035 = vunpack.c.l.b16 %v1970
    %v2036 = vunpack.c.h.b16 %v1970
    %v2037 = vunpack.c.l.b16 %v1971
    %v2038 = vunpack.c.l.b16 %v1972
    %v2039 = vunpack.c.h.b16 %v1972
    %v2040 = vunpack.c.l.b16 %v1973
    %v2041 = vunpack.c.l.b16 %v1974
    %v2042 = vunpack.c.h.b16 %v1974
    %v2043 = vunpack.c.l.b16 %v1975
    %v2044 = vunpack.c.l.b16 %v1976
    %v2045 = vunpack.c.h.b16 %v1976
    %v2046 = vunpack.c.l.b16 %v1977
    %v2047 = vunpack.c.l.b16 %v1978
    %v2048 = vunpack.c.h.b16 %v1978
    %v2049 = vunpack.c.l.b16 %v1979
    %v2050 = vunpack.c.l.b16 %v1980
    %v2051 = vunpack.c.h.b16 %v1980
    %v2052 = vunpack.c.l.b16 %v1981
    %v2053 = vunpack.c.l.b16 %v1982
    %v2054 = vunpack.c.h.b16 %v1982
    %v2055 = vunpack.c.l.b16 %v1983
    %v2056 = vunpack.c.l.b16 %v1984
    %v2057 = vunpack.c.h.b16 %v1984
    %v2058 = vunpack.c.l.b16 %v1985
    %v2059 = vunpack.c.l.b16 %v1986
    %v2060 = vunpack.c.h.b16 %v1986
    %v2061 = vunpack.c.l.b16 %v1987
    %v2062 = vunpack.c.l.b16 %v1988
    %v2063 = vunpack.c.h.b16 %v1988
    %v2064 = vunpack.c.l.b16 %v1989
    %v2065 = vunpack.c.l.b16 %v1990
    %v2066 = vunpack.c.h.b16 %v1990
    %v2067 = vunpack.c.l.b16 %v1991
    %v2068 = vunpack.c.l.b16 %v1992
    %v2069 = vunpack.c.h.b16 %v1992
    %v2070 = vunpack.c.l.b16 %v1993
    %v2071 = vunpack.c.l.b16 %v1994
    %v2072 = vunpack.c.h.b16 %v1994
    %v2073 = vunpack.c.l.b16 %v1995
    %v2074 = vunpack.c.l.b16 %v1996
    %v2075 = vunpack.c.h.b16 %v1996
    %v2076 = vunpack.c.l.b16 %v1997
    %v2077 = vunpack.c.l.b16 %v1998
    %v2078 = vunpack.c.h.b16 %v1998
    %v2079 = vunpack.c.l.b16 %v1999
    %v2080 = vpack.c.b16 %v2035, %v2032
    %v2081 = vpack.c.b16 %v2036, %v2033
    %v2082 = vpack.c.b16 %v2037, %v2034
    %v2083 = vpack.c.b16 %v2041, %v2038
    %v2084 = vpack.c.b16 %v2042, %v2039
    %v2085 = vpack.c.b16 %v2043, %v2040
    %v2086 = vpack.c.b16 %v2047, %v2044
    %v2087 = vpack.c.b16 %v2048, %v2045
    %v2088 = vpack.c.b16 %v2049, %v2046
    %v2089 = vpack.c.b16 %v2053, %v2050
    %v2090 = vpack.c.b16 %v2054, %v2051
    %v2091 = vpack.c.b16 %v2055, %v2052
    %v2092 = vpack.c.b16 %v2059, %v2056
    %v2093 = vpack.c.b16 %v2060, %v2057
    %v2094 = vpack.c.b16 %v2061, %v2058
    %v2095 = vpack.c.b16 %v2065, %v2062
    %v2096 = vpack.c.b16 %v2066, %v2063
    %v2097 = vpack.c.b16 %v2067, %v2064
    %v2098 = vpack.c.b16 %v2071, %v2068
    %v2099 = vpack.c.b16 %v2072, %v2069
    %v2100 = vpack.c.b16 %v2073, %v2070
    %v2101 = vpack.c.b16 %v2077, %v2074
    %v2102 = vpack.c.b16 %v2078, %v2075
    %v2103 = vpack.c.b16 %v2079, %v2076
    %2128 = vmatprep.subr.bf16.mxu0 %v2081
    %2129 = vmatpush1.bf16.msra.mxu0 %v2080
    %2130 = vmatprep.subr.bf16.mxu0 %v2084
    %2131 = vmatpush1.bf16.msra.mxu0 %v2083
    %2132 = vmatprep.subr.bf16.mxu0 %v2087
    %2133 = vmatpush1.bf16.msra.mxu0 %v2086
    %2134 = vmatprep.subr.bf16.mxu0 %v2090
    %2135 = vmatpush1.bf16.msra.mxu0 %v2089
    %2136 = vmatprep.subr.bf16.mxu0 %v2093
    %2137 = vmatpush1.bf16.msra.mxu0 %v2092
    %2138 = vmatprep.subr.bf16.mxu0 %v2096
    %2139 = vmatpush1.bf16.msra.mxu0 %v2095
    %2140 = vmatprep.subr.bf16.mxu0 %v2099
    %2141 = vmatpush1.bf16.msra.mxu0 %v2098
    %2142 = vmatprep.subr.bf16.mxu0 %v2102
    %2143 = vmatpush1.bf16.msra.mxu0 %v2101
    %2144 = vmatprep.subr.bf16.mxu0 0
    %2145 = vmatpush1.bf16.msra.mxu0 0
    %2146 = vmatprep.subr.bf16.mxu0 0
    %2147 = vmatpush1.bf16.msra.mxu0 0
    %2148 = vmatprep.subr.bf16.mxu0 0
    %2149 = vmatpush1.bf16.msra.mxu0 0
    %2150 = vmatprep.subr.bf16.mxu0 0
    %2151 = vmatpush1.bf16.msra.mxu0 0
    %2152 = vmatprep.subr.bf16.mxu0 0
    %2153 = vmatpush1.bf16.msra.mxu0 0
    %2154 = vmatprep.subr.bf16.mxu0 0
    %2155 = vmatpush1.bf16.msra.mxu0 0
    %2156 = vmatprep.subr.bf16.mxu0 0
    %2157 = vmatpush1.bf16.msra.mxu0 0
    %2158 = vmatprep.subr.bf16.mxu0 0
    %2159 = vmatpush1.bf16.msra.mxu0 0
    %2160 = vmatprep.mubr.bf16.mxu0 0
    %2161 = vmatmul.mubr.bf16.gmra.mrb[0].mxu0 %v1967
    %v2162 = vpop.f32.mrb[0].mxu0
    %v2163 = vadd.f32 0.0, %v2162
    %v2164 = vpop.f32.mrb[0].mxu0
    %v2165 = vadd.f32 0.0, %v2164
    %v2166 = vpop.f32.mrb[0].mxu0
    %v2167 = vpop.f32.mrb[0].mxu0
    %2168 = vdwg.mxu0
    %2169 = vmatprep.subr.bf16.mxu0 0
    %2170 = vmatpush1.bf16.msra.mxu0 %v2082
    %2171 = vmatprep.subr.bf16.mxu0 0
    %2172 = vmatpush1.bf16.msra.mxu0 %v2085
    %2173 = vmatprep.subr.bf16.mxu0 0
    %2174 = vmatpush1.bf16.msra.mxu0 %v2088
    %2175 = vmatprep.subr.bf16.mxu0 0
    %2176 = vmatpush1.bf16.msra.mxu0 %v2091
    %2177 = vmatprep.subr.bf16.mxu0 0
    %2178 = vmatpush1.bf16.msra.mxu0 %v2094
    %2179 = vmatprep.subr.bf16.mxu0 0
    %2180 = vmatpush1.bf16.msra.mxu0 %v2097
    %2181 = vmatprep.subr.bf16.mxu0 0
    %2182 = vmatpush1.bf16.msra.mxu0 %v2100
    %2183 = vmatprep.subr.bf16.mxu0 0
    %2184 = vmatpush1.bf16.msra.mxu0 %v2103
    %2185 = vmatprep.subr.bf16.mxu0 0
    %2186 = vmatpush1.bf16.msra.mxu0 0
    %2187 = vmatprep.subr.bf16.mxu0 0
    %2188 = vmatpush1.bf16.msra.mxu0 0
    %2189 = vmatprep.subr.bf16.mxu0 0
    %2190 = vmatpush1.bf16.msra.mxu0 0
    %2191 = vmatprep.subr.bf16.mxu0 0
    %2192 = vmatpush1.bf16.msra.mxu0 0
    %2193 = vmatprep.subr.bf16.mxu0 0
    %2194 = vmatpush1.bf16.msra.mxu0 0
    %2195 = vmatprep.subr.bf16.mxu0 0
    %2196 = vmatpush1.bf16.msra.mxu0 0
    %2197 = vmatprep.subr.bf16.mxu0 0
    %2198 = vmatpush1.bf16.msra.mxu0 0
    %2199 = vmatprep.subr.bf16.mxu0 0
    %2200 = vmatpush1.bf16.msra.mxu0 0
    %2201 = vmatprep.mubr.bf16.mxu0 0
    %2202 = vmatmul.mubr.bf16.gmra.mrb[0].mxu0 %v1967
    %v2203 = vpop.f32.mrb[0].mxu0
    %v2204 = vadd.f32 0.0, %v2203
    %v2205 = vpop.f32.mrb[0].mxu0
    %v2206 = vpop.f32.mrb[0].mxu0
    %v2207 = vpop.f32.mrb[0].mxu0
    %2208 = vdwg.mxu0
    %v2209 = vadd.f32 %v1964, %v2163
    %v2210 = vxor.u32 %v2209, 2147483648
    %v2211 = vmul.f32 %v2210, 1.442695
    %v2212 = vpow.pop %v2211
    %v2213 = vadd.f32 %v2212, 1.0
    %v2214 = vrcp.pop %v2213
    %v2215 = vmul.f32 1.0, %v2214
    %v2216 = vadd.f32 %v1965, %v2165
    %v2217 = vxor.u32 %v2216, 2147483648
    %v2218 = vmul.f32 %v2217, 1.442695
    %v2219 = vpow.pop %v2218
    %v2220 = vadd.f32 %v2219, 1.0
    %v2221 = vrcp.pop %v2220
    %v2222 = vmul.f32 1.0, %v2221
    %v2223 = vadd.f32 %v2204, %v288
    %v2224 = vmul.f32 %v2215, %v2223
    %v2225 = vadd.f32 %v1966, %v2224
    %v2226 = vtanh.pop %v2225
    %v2227 = vsub.f32 %v1960, %v2226
    %v2228 = vmul.f32 %v2222, %v2227
    %v2229 = vadd.f32 %v2226, %v2228
    %vm2230 = vcmp.gt.s32.totalorder %v282, 6
    %v2231 = vsel %vm2230, 1, 0
    %2232 = vset.pattern.permute.xlu0 0
    %2233 = vperm.xlu0 %2232, %v2231
    %v2234 = vpop.permute.xlu0 %2233
    %vm2235 = vcmp.eq.s32.totalorder %v2234, 1
    %v2236 = vsel %vm2235, %v2229, 0.0
    %s2237 = scalar_lea.vmem [#allocation6], 48
    %2238 = vst [vmem:[%s2237] sm:$0xff] %v2236
    %v2239 = vsel %vm2235, %v2229, %v1960
    %s2240 = smul.u32 7, 3
    %s2241 = smul.addr %s2240, 8
    %s2242 = scalar_lea.vmem [#allocation2], %s2241
    %v2243 = vld [vmem:[%s2242] sm:$0xff]
    %v2244 = vld [vmem:[%s2242 + $0x8] sm:$0xff]
    %v2245 = vld [vmem:[%s2242 + $0x10] sm:$0xff]
    %v2246 = vpack.c.bf16 %v2239, %v2239
    %v2247 = vld [vmem:[#allocation3] sm:$0xff]
    %v2248 = vld [vmem:[#allocation3 + $0x8] sm:$0xf]
    %v2249 = vld [vmem:[#allocation3 + $0xc] sm:$0xff]
    %v2250 = vld [vmem:[#allocation3 + $0x14] sm:$0xf]
    %v2251 = vld [vmem:[#allocation3 + $0x18] sm:$0xff]
    %v2252 = vld [vmem:[#allocation3 + $0x20] sm:$0xf]
    %v2253 = vld [vmem:[#allocation3 + $0x24] sm:$0xff]
    %v2254 = vld [vmem:[#allocation3 + $0x2c] sm:$0xf]
    %v2255 = vld [vmem:[#allocation3 + $0x30] sm:$0xff]
    %v2256 = vld [vmem:[#allocation3 + $0x38] sm:$0xf]
    %v2257 = vld [vmem:[#allocation3 + $0x3c] sm:$0xff]
    %v2258 = vld [vmem:[#allocation3 + $0x44] sm:$0xf]
    %v2259 = vld [vmem:[#allocation3 + $0x48] sm:$0xff]
    %v2260 = vld [vmem:[#allocation3 + $0x50] sm:$0xf]
    %v2261 = vld [vmem:[#allocation3 + $0x54] sm:$0xff]
    %v2262 = vld [vmem:[#allocation3 + $0x5c] sm:$0xf]
    %v2263 = vld [vmem:[#allocation3 + $0x60] sm:$0xff]
    %v2264 = vld [vmem:[#allocation3 + $0x68] sm:$0xf]
    %v2265 = vld [vmem:[#allocation3 + $0x6c] sm:$0xff]
    %v2266 = vld [vmem:[#allocation3 + $0x74] sm:$0xf]
    %v2267 = vld [vmem:[#allocation3 + $0x78] sm:$0xff]
    %v2268 = vld [vmem:[#allocation3 + $0x80] sm:$0xf]
    %v2269 = vld [vmem:[#allocation3 + $0x84] sm:$0xff]
    %v2270 = vld [vmem:[#allocation3 + $0x8c] sm:$0xf]
    %v2271 = vld [vmem:[#allocation3 + $0x90] sm:$0xff]
    %v2272 = vld [vmem:[#allocation3 + $0x98] sm:$0xf]
    %v2273 = vld [vmem:[#allocation3 + $0x9c] sm:$0xff]
    %v2274 = vld [vmem:[#allocation3 + $0xa4] sm:$0xf]
    %v2275 = vld [vmem:[#allocation3 + $0xa8] sm:$0xff]
    %v2276 = vld [vmem:[#allocation3 + $0xb0] sm:$0xf]
    %v2277 = vld [vmem:[#allocation3 + $0xb4] sm:$0xff]
    %v2278 = vld [vmem:[#allocation3 + $0xbc] sm:$0xf]
    %v2311 = vunpack.c.l.b16 %v2247
    %v2312 = vunpack.c.h.b16 %v2247
    %v2313 = vunpack.c.l.b16 %v2248
    %v2314 = vunpack.c.l.b16 %v2249
    %v2315 = vunpack.c.h.b16 %v2249
    %v2316 = vunpack.c.l.b16 %v2250
    %v2317 = vunpack.c.l.b16 %v2251
    %v2318 = vunpack.c.h.b16 %v2251
    %v2319 = vunpack.c.l.b16 %v2252
    %v2320 = vunpack.c.l.b16 %v2253
    %v2321 = vunpack.c.h.b16 %v2253
    %v2322 = vunpack.c.l.b16 %v2254
    %v2323 = vunpack.c.l.b16 %v2255
    %v2324 = vunpack.c.h.b16 %v2255
    %v2325 = vunpack.c.l.b16 %v2256
    %v2326 = vunpack.c.l.b16 %v2257
    %v2327 = vunpack.c.h.b16 %v2257
    %v2328 = vunpack.c.l.b16 %v2258
    %v2329 = vunpack.c.l.b16 %v2259
    %v2330 = vunpack.c.h.b16 %v2259
    %v2331 = vunpack.c.l.b16 %v2260
    %v2332 = vunpack.c.l.b16 %v2261
    %v2333 = vunpack.c.h.b16 %v2261
    %v2334 = vunpack.c.l.b16 %v2262
    %v2335 = vunpack.c.l.b16 %v2263
    %v2336 = vunpack.c.h.b16 %v2263
    %v2337 = vunpack.c.l.b16 %v2264
    %v2338 = vunpack.c.l.b16 %v2265
    %v2339 = vunpack.c.h.b16 %v2265
    %v2340 = vunpack.c.l.b16 %v2266
    %v2341 = vunpack.c.l.b16 %v2267
    %v2342 = vunpack.c.h.b16 %v2267
    %v2343 = vunpack.c.l.b16 %v2268
    %v2344 = vunpack.c.l.b16 %v2269
    %v2345 = vunpack.c.h.b16 %v2269
    %v2346 = vunpack.c.l.b16 %v2270
    %v2347 = vunpack.c.l.b16 %v2271
    %v2348 = vunpack.c.h.b16 %v2271
    %v2349 = vunpack.c.l.b16 %v2272
    %v2350 = vunpack.c.l.b16 %v2273
    %v2351 = vunpack.c.h.b16 %v2273
    %v2352 = vunpack.c.l.b16 %v2274
    %v2353 = vunpack.c.l.b16 %v2275
    %v2354 = vunpack.c.h.b16 %v2275
    %v2355 = vunpack.c.l.b16 %v2276
    %v2356 = vunpack.c.l.b16 %v2277
    %v2357 = vunpack.c.h.b16 %v2277
    %v2358 = vunpack.c.l.b16 %v2278
    %v2359 = vpack.c.b16 %v2314, %v2311
    %v2360 = vpack.c.b16 %v2315, %v2312
    %v2361 = vpack.c.b16 %v2316, %v2313
    %v2362 = vpack.c.b16 %v2320, %v2317
    %v2363 = vpack.c.b16 %v2321, %v2318
    %v2364 = vpack.c.b16 %v2322, %v2319
    %v2365 = vpack.c.b16 %v2326, %v2323
    %v2366 = vpack.c.b16 %v2327, %v2324
    %v2367 = vpack.c.b16 %v2328, %v2325
    %v2368 = vpack.c.b16 %v2332, %v2329
    %v2369 = vpack.c.b16 %v2333, %v2330
    %v2370 = vpack.c.b16 %v2334, %v2331
    %v2371 = vpack.c.b16 %v2338, %v2335
    %v2372 = vpack.c.b16 %v2339, %v2336
    %v2373 = vpack.c.b16 %v2340, %v2337
    %v2374 = vpack.c.b16 %v2344, %v2341
    %v2375 = vpack.c.b16 %v2345, %v2342
    %v2376 = vpack.c.b16 %v2346, %v2343
    %v2377 = vpack.c.b16 %v2350, %v2347
    %v2378 = vpack.c.b16 %v2351, %v2348
    %v2379 = vpack.c.b16 %v2352, %v2349
    %v2380 = vpack.c.b16 %v2356, %v2353
    %v2381 = vpack.c.b16 %v2357, %v2354
    %v2382 = vpack.c.b16 %v2358, %v2355
    %2407 = vmatprep.subr.bf16.mxu0 %v2360
    %2408 = vmatpush1.bf16.msra.mxu0 %v2359
    %2409 = vmatprep.subr.bf16.mxu0 %v2363
    %2410 = vmatpush1.bf16.msra.mxu0 %v2362
    %2411 = vmatprep.subr.bf16.mxu0 %v2366
    %2412 = vmatpush1.bf16.msra.mxu0 %v2365
    %2413 = vmatprep.subr.bf16.mxu0 %v2369
    %2414 = vmatpush1.bf16.msra.mxu0 %v2368
    %2415 = vmatprep.subr.bf16.mxu0 %v2372
    %2416 = vmatpush1.bf16.msra.mxu0 %v2371
    %2417 = vmatprep.subr.bf16.mxu0 %v2375
    %2418 = vmatpush1.bf16.msra.mxu0 %v2374
    %2419 = vmatprep.subr.bf16.mxu0 %v2378
    %2420 = vmatpush1.bf16.msra.mxu0 %v2377
    %2421 = vmatprep.subr.bf16.mxu0 %v2381
    %2422 = vmatpush1.bf16.msra.mxu0 %v2380
    %2423 = vmatprep.subr.bf16.mxu0 0
    %2424 = vmatpush1.bf16.msra.mxu0 0
    %2425 = vmatprep.subr.bf16.mxu0 0
    %2426 = vmatpush1.bf16.msra.mxu0 0
    %2427 = vmatprep.subr.bf16.mxu0 0
    %2428 = vmatpush1.bf16.msra.mxu0 0
    %2429 = vmatprep.subr.bf16.mxu0 0
    %2430 = vmatpush1.bf16.msra.mxu0 0
    %2431 = vmatprep.subr.bf16.mxu0 0
    %2432 = vmatpush1.bf16.msra.mxu0 0
    %2433 = vmatprep.subr.bf16.mxu0 0
    %2434 = vmatpush1.bf16.msra.mxu0 0
    %2435 = vmatprep.subr.bf16.mxu0 0
    %2436 = vmatpush1.bf16.msra.mxu0 0
    %2437 = vmatprep.subr.bf16.mxu0 0
    %2438 = vmatpush1.bf16.msra.mxu0 0
    %2439 = vmatprep.mubr.bf16.mxu0 0
    %2440 = vmatmul.mubr.bf16.gmra.mrb[0].mxu0 %v2246
    %v2441 = vpop.f32.mrb[0].mxu0
    %v2442 = vadd.f32 0.0, %v2441
    %v2443 = vpop.f32.mrb[0].mxu0
    %v2444 = vadd.f32 0.0, %v2443
    %v2445 = vpop.f32.mrb[0].mxu0
    %v2446 = vpop.f32.mrb[0].mxu0
    %2447 = vdwg.mxu0
    %2448 = vmatprep.subr.bf16.mxu0 0
    %2449 = vmatpush1.bf16.msra.mxu0 %v2361
    %2450 = vmatprep.subr.bf16.mxu0 0
    %2451 = vmatpush1.bf16.msra.mxu0 %v2364
    %2452 = vmatprep.subr.bf16.mxu0 0
    %2453 = vmatpush1.bf16.msra.mxu0 %v2367
    %2454 = vmatprep.subr.bf16.mxu0 0
    %2455 = vmatpush1.bf16.msra.mxu0 %v2370
    %2456 = vmatprep.subr.bf16.mxu0 0
    %2457 = vmatpush1.bf16.msra.mxu0 %v2373
    %2458 = vmatprep.subr.bf16.mxu0 0
    %2459 = vmatpush1.bf16.msra.mxu0 %v2376
    %2460 = vmatprep.subr.bf16.mxu0 0
    %2461 = vmatpush1.bf16.msra.mxu0 %v2379
    %2462 = vmatprep.subr.bf16.mxu0 0
    %2463 = vmatpush1.bf16.msra.mxu0 %v2382
    %2464 = vmatprep.subr.bf16.mxu0 0
    %2465 = vmatpush1.bf16.msra.mxu0 0
    %2466 = vmatprep.subr.bf16.mxu0 0
    %2467 = vmatpush1.bf16.msra.mxu0 0
    %2468 = vmatprep.subr.bf16.mxu0 0
    %2469 = vmatpush1.bf16.msra.mxu0 0
    %2470 = vmatprep.subr.bf16.mxu0 0
    %2471 = vmatpush1.bf16.msra.mxu0 0
    %2472 = vmatprep.subr.bf16.mxu0 0
    %2473 = vmatpush1.bf16.msra.mxu0 0
    %2474 = vmatprep.subr.bf16.mxu0 0
    %2475 = vmatpush1.bf16.msra.mxu0 0
    %2476 = vmatprep.subr.bf16.mxu0 0
    %2477 = vmatpush1.bf16.msra.mxu0 0
    %2478 = vmatprep.subr.bf16.mxu0 0
    %2479 = vmatpush1.bf16.msra.mxu0 0
    %2480 = vmatprep.mubr.bf16.mxu0 0
    %2481 = vmatmul.mubr.bf16.gmra.mrb[0].mxu0 %v2246
    %v2482 = vpop.f32.mrb[0].mxu0
    %v2483 = vadd.f32 0.0, %v2482
    %v2484 = vpop.f32.mrb[0].mxu0
    %v2485 = vpop.f32.mrb[0].mxu0
    %v2486 = vpop.f32.mrb[0].mxu0
    %2487 = vdwg.mxu0
    %v2488 = vadd.f32 %v2243, %v2442
    %v2489 = vxor.u32 %v2488, 2147483648
    %v2490 = vmul.f32 %v2489, 1.442695
    %v2491 = vpow.pop %v2490
    %v2492 = vadd.f32 %v2491, 1.0
    %v2493 = vrcp.pop %v2492
    %v2494 = vmul.f32 1.0, %v2493
    %v2495 = vadd.f32 %v2244, %v2444
    %v2496 = vxor.u32 %v2495, 2147483648
    %v2497 = vmul.f32 %v2496, 1.442695
    %v2498 = vpow.pop %v2497
    %v2499 = vadd.f32 %v2498, 1.0
    %v2500 = vrcp.pop %v2499
    %v2501 = vmul.f32 1.0, %v2500
    %v2502 = vadd.f32 %v2483, %v288
    %v2503 = vmul.f32 %v2494, %v2502
    %v2504 = vadd.f32 %v2245, %v2503
    %v2505 = vtanh.pop %v2504
    %v2506 = vsub.f32 %v2239, %v2505
    %v2507 = vmul.f32 %v2501, %v2506
    %v2508 = vadd.f32 %v2505, %v2507
    %vm2509 = vcmp.gt.s32.totalorder %v282, 7
    %v2510 = vsel %vm2509, 1, 0
    %2511 = vset.pattern.permute.xlu0 0
    %2512 = vperm.xlu0 %2511, %v2510
    %v2513 = vpop.permute.xlu0 %2512
    %vm2514 = vcmp.eq.s32.totalorder %v2513, 1
    %v2515 = vsel %vm2514, %v2508, 0.0
    %s2516 = scalar_lea.vmem [#allocation6], 56
    %2517 = vst [vmem:[%s2516] sm:$0xff] %v2515
    %v2518 = vsel %vm2514, %v2508, %v2239
    %2519 = vst [vmem:[#allocation7] sm:$0xff] %v2518
    // Predicated region
    $region30: #{tpu_custom_call.1} parent=1 // pred_check
      _
    $region31: #{tpu_custom_call.1} parent=1 // pred_check_branch
      %2521 = sbr.rel (0) target = $region33
    $region32: #{tpu_custom_call.1} parent=1 // pred_region
      %s2523 = ssub.s32 1024, 1024
      %2524 = vsyncadd [#allocation5], %s2523
      %s2525 = sshll.u32 [#allocation6], 4
      %s2526 = int_to_ptr.vmem [resolvable:$true] %s2525
      %2531 = dma.vmem_to_hbm [thread:$0]  %s2526, 1024, %s6, [#allocation5], 128, 128, 8
    $region33: #{tpu_custom_call.1} parent=1 // pred_fallthru
      _
    // Predicated region
    $region34: #{tpu_custom_call.1} parent=1 // pred_check
      _
    $region35: #{tpu_custom_call.1} parent=1 // pred_check_branch
      %2533 = sbr.rel (0) target = $region37
    $region36: #{tpu_custom_call.1} parent=1 // pred_region
      %s2535 = ssub.s32 128, 128
      %2536 = vsyncadd [#allocation8], %s2535
      %s2538 = sshll.u32 [#allocation7], 4
      %s2539 = int_to_ptr.vmem [resolvable:$true] %s2538
      %2541 = dma.vmem_to_hbm [thread:$0]  %s2539, 128, %s7, [#allocation8]
    $region37: #{tpu_custom_call.1} parent=1 // pred_fallthru
      _
    // Predicated region
    $region38: #{tpu_custom_call.1} parent=1 // pred_check
      _
    $region39: #{tpu_custom_call.1} parent=1 // pred_check_branch
      %2543 = sbr.rel (0) target = $region41
    $region40: #{tpu_custom_call.1} parent=1 // pred_region
      %2544 = dma.done [#allocation5], 1024
    $region41: #{tpu_custom_call.1} parent=1 // pred_fallthru
      _
    // Predicated region
    $region42: #{tpu_custom_call.1} parent=1 // pred_check
      _
    $region43: #{tpu_custom_call.1} parent=1 // pred_check_branch
      %2546 = sbr.rel (0) target = $region45
    $region44: #{tpu_custom_call.1} parent=1 // pred_region
      %2547 = dma.done [#allocation8], 128
    $region45: #{tpu_custom_call.1} parent=1 // pred_fallthru
      _
    %2548 = vsyncpa [#allocation4], 1
    %2549 = vsyncpa [#allocation5], 1
    %2550 = vsyncpa [#allocation8], 1

</llo_original>
